<compile_context>
chip_gen: v7x
topology: tpu7x:2x2x1
jax: 0.10.0
libtpu: 0.0.40
codegen_flags: <defaults>
</compile_context>

<pallas_src>
import functools

import jax
import jax.numpy as jnp
import numpy as np
from jax.experimental import pallas as pl
from jax.experimental.pallas import tpu as pltpu

EMBED_DIM  = 32
ATT_HEADS  = 4
HEAD_DIM   = EMBED_DIM // ATT_HEADS          # 8
ATT_MID    = 16                              # att_mid_dim = [HEAD_DIM, ATT_MID, HEAD_DIM]
LAYER_NUM  = 2
CELU_ALPHA = 1.3                             # cfg.MODEL.BILINEAR.ACT = 'CELU'
GN_EPS     = 1e-5
LN_EPS     = 1e-5

HM   = ATT_HEADS * ATT_MID                   # 64  : packed per-head attention-mid width
KV_W = 2 * EMBED_DIM * LAYER_NUM             # 128 : [k0|v2_0|k1|v2_1] packed along lanes
QV_W = 2 * EMBED_DIM                         # 64  : [q|v1] packed along lanes (per layer)


def _celu(x, alpha):
    return jnp.where(x > 0, x, alpha * (jnp.exp(x / alpha) - 1.0))


# ---------------------------------------------------------------------------
# Fused kernel: gv init + LAYER_NUM x (LowRank + SCAtt) + proj + LayerNorm
# (one grid step = one batch tile of Bb rows)
# ---------------------------------------------------------------------------
def dec_block_kernel(
    gv_ref, feats_ref, mask_ref,
    w_kv_ref, b_kv_ref, g_kv_ref, bt_kv_ref, m2_kv_ref,      # hoisted feats (k|v2) proj
    w_qv_ref, b_qv_ref, g_qv_ref, bt_qv_ref, m2_qv_ref,      # per-layer gv (q|v1) proj
    w_basic_ref, b_basic_ref,                                 # (L,D,HM), (L,1,HM)
    w_last_ref, b_last_ref,                                   # (L,HM,2D), (L,1,2D)
    proj_w_ref, proj_b_ref, ln_w_ref, ln_b_ref,               # (3D,D), (1,D), (1,D), (1,D)
    out_ref,
    *, num_layers, use_mean_init):
    cdt = w_kv_ref.dtype                        # compute/storage dtype of the matmul path
    feats = feats_ref[...].astype(jnp.float32)  # (Bb, M, D)
    mask = mask_ref[...]                        # (Bb, M)
    Bb, M, D = feats.shape
    mask3 = mask[:, :, None]                    # (Bb, M, 1)

    # Mask statistics hoisted once, shared by gv init + both layers' pooling.
    msum = jnp.maximum(jnp.sum(mask3, axis=1), 1e-6)          # (Bb, 1)
    inv_msum = pl.reciprocal(msum, approx=True)               # EUP slot

    if use_mean_init:                                         # torch sentinel gv (B,1)
        gv = jnp.sum(feats * mask3, axis=1) * inv_msum        # (Bb, D)
    else:
        gv = gv_ref[...].astype(jnp.float32)

    def gn_onepass(y, gamma, beta, m2):
        # One-pass GroupNorm stats: one averaging matmul on [y | y*y] -> [E[x] | E[x^2]].
        W = y.shape[-1]
        packed = jnp.concatenate([y, y * y], axis=-1)                      # f32 stats path
        stats = jnp.dot(packed, m2, preferred_element_type=jnp.float32)
        mean = stats[:, :W]
        var = jnp.maximum(stats[:, W:] - mean * mean, 0.0)
        return (y - mean) * jax.lax.rsqrt(var + GN_EPS) * gamma + beta

    # ---- Hoisted feats projection for BOTH layers: lanes = [k0|v2_0|k1|v2_1] ----
    flat = feats.reshape(Bb * M, D)
    ykv = jnp.dot(flat.astype(cdt), w_kv_ref[...],
                  preferred_element_type=jnp.float32) + b_kv_ref[...]
    ykv = _celu(ykv, CELU_ALPHA)
    ykv = gn_onepass(ykv, g_kv_ref[...], bt_kv_ref[...], m2_kv_ref[...])   # (Bb*M, 128)
    ykv3 = ykv.reshape(Bb, M, 2 * D * num_layers)

    feat_list = [gv]
    for li in range(num_layers):                                           # static unroll
        # Per-layer q|v1 projection of gv (gv changes every layer, cannot be hoisted).
        yg = jnp.dot(gv.astype(cdt), w_qv_ref[li],
                     preferred_element_type=jnp.float32) + b_qv_ref[li]
        yg = _celu(yg, CELU_ALPHA)
        yg = gn_onepass(yg, g_qv_ref[li], bt_qv_ref[li], m2_qv_ref[...])   # (Bb, 64)
        q, v1 = yg[:, :D], yg[:, D:]

        k  = ykv3[:, :, li * 2 * D: li * 2 * D + D]                        # (Bb, M, D)
        v2 = ykv3[:, :, li * 2 * D + D: (li + 1) * 2 * D]                  # (Bb, M, D)

        # attention_basic: per-head Linear(HEAD_DIM, ATT_MID) + ReLU (block-diag weights)
        att_map = (q[:, None, :] * k).reshape(Bb * M, D)
        h = jnp.dot(att_map.astype(cdt), w_basic_ref[li],
                    preferred_element_type=jnp.float32) + b_basic_ref[li]
        h = jnp.maximum(h, 0.0)                                            # (Bb*M, HM)

        # Packed [attention_last (spatial, channel-expanded) | attention_last2 (channel)]
        sp = jnp.dot(h.astype(cdt), w_last_ref[li],
                     preferred_element_type=jnp.float32) + b_last_ref[li]  # (Bb*M, 2D)
        h3 = h.reshape(Bb, M, HM)
        pool = jnp.sum(h3 * mask3, axis=1) * inv_msum                      # (Bb, HM)
        ch = jnp.dot(pool.astype(cdt), w_last_ref[li],
                     preferred_element_type=jnp.float32) + b_last_ref[li]  # (Bb, 2D)
        alpha_ch = jax.nn.sigmoid(ch[:, D:])                               # (Bb, D)

        # Masked softmax over M; logits are already duplicated within each head's
        # HEAD_DIM lanes, so per-lane softmax == expand-after-softmax.  Exact divide.
        logits = sp[:, :D].reshape(Bb, M, D)
        logits = jnp.where(mask3 == 0.0, -1e9, logits)
        logits = logits - jnp.max(logits, axis=1, keepdims=True)
        e = jnp.exp(logits)
        alpha_sp = e / jnp.sum(e, axis=1, keepdims=True)

        v2_att = jnp.sum(alpha_sp * v2, axis=1)                            # (Bb, D)
        gv = v1 * v2_att * alpha_ch
        feat_list.append(gv)

    # Fused output projection: concat([gv0,gv1,gv2], -1) @ proj_w in ONE (Bb,96)x(96,32).
    cat = jnp.concatenate(feat_list, axis=-1)
    y = jnp.dot(cat.astype(cdt), proj_w_ref[...],
                preferred_element_type=jnp.float32) + proj_b_ref[...]
    mu = jnp.mean(y, axis=-1, keepdims=True)
    var = jnp.mean((y - mu) ** 2, axis=-1, keepdims=True)
    y = (y - mu) * jax.lax.rsqrt(var + LN_EPS)
    out_ref[...] = (y * ln_w_ref[...] + ln_b_ref[...]).astype(out_ref.dtype)


# ---------------------------------------------------------------------------
# Parameter init (torch-like layout) + one-time packing into kernel slabs
# ---------------------------------------------------------------------------
def init_params(key):
    def lin(k, fan_in, fan_out, scale=0.05):
        kw, kb = jax.random.split(k)
        return (scale * jax.random.normal(kw, (fan_in, fan_out), jnp.float32),
                scale * jax.random.normal(kb, (1, fan_out), jnp.float32))

    layers = []
    keys = jax.random.split(key, LAYER_NUM + 1)
    for li in range(LAYER_NUM):
        ks = jax.random.split(keys[li], 16)
        p = {}
        for name, kk in zip(['q', 'k', 'v1', 'v2'],
                            [ks[0:3], ks[3:6], ks[6:9], ks[9:12]]):
            w, b = lin(kk[0], EMBED_DIM, EMBED_DIM)
            p['w' + name], p['b' + name] = w, b
            p['g' + name + '_w'] = 1.0 + 0.1 * jax.random.normal(kk[1], (1, EMBED_DIM), jnp.float32)
            p['g' + name + '_b'] = 0.1 * jax.random.normal(kk[2], (1, EMBED_DIM), jnp.float32)
        p['w_basic'], p['b_basic'] = lin(ks[12], HEAD_DIM, ATT_MID)
        p['w_last'], p['b_last'] = lin(ks[13], ATT_MID, 1)
        p['w_last2'], p['b_last2'] = lin(ks[14], ATT_MID, HEAD_DIM)
        layers.append(p)
    kproj = jax.random.split(keys[-1], 3)
    pw, pb = lin(kproj[0], EMBED_DIM * (LAYER_NUM + 1), EMBED_DIM)
    return {
        'layers': layers,
        'proj_w': pw, 'proj_b': pb,
        'ln_w': 1.0 + 0.1 * jax.random.normal(kproj[1], (1, EMBED_DIM), jnp.float32),
        'ln_b': 0.1 * jax.random.normal(kproj[2], (1, EMBED_DIM), jnp.float32),
    }


def pack_params(params, dtype=jnp.float32):
    """One-time transform of torch-style params into lane-dense kernel slabs.
    `dtype` (f32 or bf16) applies to matmul weights only; biases, GN/LN affines and the
    GroupNorm averaging matrices stay f32 (statistics must be f32)."""
    H, Dh, D = ATT_HEADS, HEAD_DIM, EMBED_DIM
    eye_h = jnp.eye(H, dtype=jnp.float32)
    w_kv, b_kv, g_kv, bt_kv = [], [], [], []
    w_qv, b_qv, g_qv, bt_qv = [], [], [], []
    w_basic, b_basic, w_last, b_last = [], [], [], []
    for p in params['layers']:
        # feats path needs only k|v2 (q|v1 of feats were dead work); hoisted across layers.
        w_kv += [p['wk'], p['wv2']];        b_kv += [p['bk'], p['bv2']]
        g_kv += [p['gk_w'], p['gv2_w']];    bt_kv += [p['gk_b'], p['gv2_b']]
        # gv path needs only q|v1, per layer.
        w_qv.append(jnp.concatenate([p['wq'], p['wv1']], axis=1))
        b_qv.append(jnp.concatenate([p['bq'], p['bv1']], axis=1))
        g_qv.append(jnp.concatenate([p['gq_w'], p['gv1_w']], axis=1))
        bt_qv.append(jnp.concatenate([p['gq_b'], p['gv1_b']], axis=1))
        w_basic.append(jnp.kron(eye_h, p['w_basic']))                       # (D, HM)
        b_basic.append(jnp.tile(p['b_basic'], (1, H)))                      # (1, HM)
        # attention_last expanded to channel width (head logit duplicated over HEAD_DIM lanes)
        w_sp = jnp.kron(eye_h, jnp.tile(p['w_last'], (1, Dh)))              # (HM, D)
        b_sp = jnp.tile(p['b_last'], (1, D))                                # (1, D)
        w_ch = jnp.kron(eye_h, p['w_last2'])                                # (HM, D)
        b_ch = jnp.tile(p['b_last2'], (1, H))                               # (1, D)
        w_last.append(jnp.concatenate([w_sp, w_ch], axis=1))                # (HM, 2D)
        b_last.append(jnp.concatenate([b_sp, b_ch], axis=1))                # (1, 2D)

    def avg_onepass(width):
        m = np.kron(np.eye(width // Dh), np.ones((Dh, Dh)) / Dh)
        return jnp.asarray(np.kron(np.eye(2), m), jnp.float32)              # block_diag(m, m)

    return {
        'w_kv': jnp.concatenate(w_kv, axis=1).astype(dtype),                # (D, 128)
        'b_kv': jnp.concatenate(b_kv, axis=1),
        'g_kv': jnp.concatenate(g_kv, axis=1),
        'bt_kv': jnp.concatenate(bt_kv, axis=1),
        'm2_kv': avg_onepass(KV_W),                                         # (256, 256)
        'w_qv': jnp.stack(w_qv).astype(dtype),                              # (L, D, 64)
        'b_qv': jnp.stack(b_qv), 'g_qv': jnp.stack(g_qv), 'bt_qv': jnp.stack(bt_qv),
        'm2_qv': avg_onepass(QV_W),                                         # (128, 128)
        'w_basic': jnp.stack(w_basic).astype(dtype), 'b_basic': jnp.stack(b_basic),
        'w_last': jnp.stack(w_last).astype(dtype), 'b_last': jnp.stack(b_last),
        'proj_w': params['proj_w'].astype(dtype),                           # (96, 32)
        'proj_b': params['proj_b'], 'ln_w': params['ln_w'], 'ln_b': params['ln_b'],
    }


_WKEYS = ('w_kv', 'b_kv', 'g_kv', 'bt_kv', 'm2_kv',
          'w_qv', 'b_qv', 'g_qv', 'bt_qv', 'm2_qv',
          'w_basic', 'b_basic', 'w_last', 'b_last',
          'proj_w', 'proj_b', 'ln_w', 'ln_b')


def _resident_spec(w):
    nd = w.ndim
    return pl.BlockSpec(w.shape, lambda b: (0,) * nd)     # same block every step -> DMA'd once


@functools.partial(jax.jit, static_argnames=("block_b",))
def dec_block_forward(gv_feat, att_feats, att_mask, packed, block_b=None):
    B, M, D = att_feats.shape
    use_mean_init = (gv_feat.shape[-1] == 1)               # torch sentinel -> masked-mean init
    dtype = packed['w_kv'].dtype

    # Batch tile: multiple of 8 (sublane) unless it covers the whole batch.  At production
    # scale size it for v7x's 64 MiB VMEM: working set ~ Bb*M*(D + KV_W + 2*HM)*4B doubled.
    if block_b is None:
        Bb = B if B <= 8 else min(128, (B // 8) * 8)
    else:
        Bb = int(block_b)
    nb = -(-B // Bb)
    Bp = nb * Bb
    assert Bb == Bp or Bb % 8 == 0, "batch tile must be a multiple of 8 or cover the batch"

    if Bp != B:                                            # pad; padded rows are fully masked
        pad = Bp - B
        gv_feat = jnp.pad(gv_feat, ((0, pad), (0, 0)))
        att_feats = jnp.pad(att_feats, ((0, pad), (0, 0), (0, 0)))
        att_mask = jnp.pad(att_mask, ((0, pad), (0, 0)))

    feats_c = att_feats.astype(dtype)                      # bf16 storage halves DMA bytes
    weights = [packed[k] for k in _WKEYS]

    # Advisory cost estimate (dominant matmuls + transcendentals).
    macs = (Bp * M * (D * KV_W + (2 * KV_W) ** 2 + LAYER_NUM * (D * HM + HM * 2 * D))
            + Bp * (LAYER_NUM * (D * QV_W + (2 * QV_W) ** 2 + HM * 2 * D) + 3 * D * D))
    trans = Bp * M * (KV_W + LAYER_NUM * D) + Bp * LAYER_NUM * (QV_W + D)
    bytes_acc = (feats_c.size * feats_c.dtype.itemsize + att_mask.size * 4
                 + gv_feat.size * 4 + Bp * D * 4
                 + sum(w.size * w.dtype.itemsize for w in weights))
    cost = pl.CostEstimate(flops=int(2 * macs), transcendentals=int(trans),
                           bytes_accessed=int(bytes_acc))

    out = pl.pallas_call(
        functools.partial(dec_block_kernel,
                          num_layers=LAYER_NUM, use_mean_init=use_mean_init),
        out_shape=jax.ShapeDtypeStruct((Bp, D), jnp.float32),
        grid=(nb,),
        in_specs=[pl.BlockSpec((Bb, gv_feat.shape[-1]), lambda b: (b, 0)),
                  pl.BlockSpec((Bb, M, D), lambda b: (b, 0, 0)),
                  pl.BlockSpec((Bb, M), lambda b: (b, 0))]
                 + [_resident_spec(w) for w in weights],
        out_specs=pl.BlockSpec((Bb, D), lambda b: (b, 0)),
        compiler_params=pltpu.CompilerParams(
            dimension_semantics=("parallel",),
            vmem_limit_bytes=32 * 1024 * 1024),
        cost_estimate=cost,
    )(gv_feat, feats_c, att_mask, *weights)
    # TODO(synk): precompute=True path (p_att_feats narrow/split) and geo_feats not exercised.
    return out[:B], att_feats[:B]


# ---------------------------------------------------------------------------
# Pure-JAX reference (PyTorch-style per-head formulation) for validation
# ---------------------------------------------------------------------------
def _ref_proj(x, w, b, gw, gb):
    y = _celu(x @ w + b, CELU_ALPHA)
    N = y.shape[0]
    yg = y.reshape(N, ATT_HEADS, HEAD_DIM)
    mu = yg.mean(-1, keepdims=True)
    var = ((yg - mu) ** 2).mean(-1, keepdims=True)
    yg = (yg - mu) / jnp.sqrt(var + GN_EPS)
    return yg.reshape(N, EMBED_DIM) * gw + gb


def ref_layer(gv, feats, mask, p):
    Bq, Mm = gv.shape[0], feats.shape[1]
    q = _ref_proj(gv, p['wq'], p['bq'], p['gq_w'], p['gq_b']).reshape(Bq, ATT_HEADS, HEAD_DIM)
    v1 = _ref_proj(gv, p['wv1'], p['bv1'], p['gv1_w'], p['gv1_b']).reshape(Bq, ATT_HEADS, HEAD_DIM)
    k = _ref_proj(feats.reshape(Bq * Mm, EMBED_DIM), p['wk'], p['bk'], p['gk_w'], p['gk_b']) \
        .reshape(Bq, Mm, ATT_HEADS, HEAD_DIM).transpose(0, 2, 1, 3)
    v2 = _ref_proj(feats.reshape(Bq * Mm, EMBED_DIM), p['wv2'], p['bv2'], p['gv2_w'], p['gv2_b']) \
        .reshape(Bq, Mm, ATT_HEADS, HEAD_DIM).transpose(0, 2, 1, 3)
    att_map = q[:, :, None, :] * k
    h = jax.nn.relu(att_map @ p['w_basic'] + p['b_basic'])
    mask_e = mask[:, None, :, None]
    pool = jnp.sum(h * mask_e, axis=2) / jnp.sum(mask_e, axis=2)
    alpha_sp = (h @ p['w_last'] + p['b_last'])[..., 0]
    alpha_sp = jnp.where(mask[:, None, :] == 0, -1e9, alpha_sp)
    alpha_sp = jax.nn.softmax(alpha_sp, axis=-1)
    alpha_ch = jax.nn.sigmoid(pool @ p['w_last2'] + p['b_last2'])
    v2o = jnp.einsum('bhm,bhmd->bhd', alpha_sp, v2)
    return (v1 * v2o * alpha_ch).reshape(Bq, EMBED_DIM)


def ref_forward(gv_feat, att_feats, att_mask, params):
    if gv_feat.shape[-1] == 1:
        m = att_mask[:, :, None]
        gv = jnp.sum(att_feats * m, axis=1) / jnp.sum(m, axis=1)
    else:
        gv = gv_feat
    arr = [gv]
    for lp in params['layers']:
        gv = ref_layer(gv, att_feats, att_mask, lp)
        arr.append(gv)
    cat = jnp.concatenate(arr, axis=-1)
    y = cat @ params['proj_w'] + params['proj_b']
    mu = y.mean(-1, keepdims=True)
    var = ((y - mu) ** 2).mean(-1, keepdims=True)
    y = (y - mu) / jnp.sqrt(var + LN_EPS) * params['ln_w'] + params['ln_b']
    return y, att_feats


if __name__ == "__main__":
    key = jax.random.PRNGKey(0)
    kp, kf, kg = jax.random.split(key, 3)
    params = init_params(kp)
    packed = pack_params(params)                          # one-time parameter packing (f32)

    # 1) Module-sized toy shapes, sentinel gv -> masked-mean init, single-tile grid.
    B, M = 2, 8
    att_feats = jax.random.normal(kf, (B, M, EMBED_DIM), jnp.float32)
    att_mask = jnp.ones((B, M), jnp.float32).at[1, 6:].set(0.0)
    gv_sent = jnp.zeros((B, 1), jnp.float32)
    out, feats_out = dec_block_forward(gv_sent, att_feats, att_mask, packed)
    out = jax.block_until_ready(out)
    ref, _ = ref_forward(gv_sent, att_feats, att_mask, params)
    assert out.shape == (B, EMBED_DIM)
    np.testing.assert_allclose(np.asarray(out), np.asarray(ref), atol=5e-3, rtol=5e-3)

    # 2) Larger batch exercising the multi-step parallel batch grid (Bb=8 -> 2 steps).
    B2 = 16
    feats2 = jax.random.normal(kg, (B2, M, EMBED_DIM), jnp.float32)
    mask2 = jnp.ones((B2, M), jnp.float32).at[3, 5:].set(0.0).at[10, 2:].set(0.0)
    gv2 = jnp.zeros((B2, 1), jnp.float32)
    o2, _ = dec_block_forward(gv2, feats2, mask2, packed, block_b=8)
    o2 = jax.block_until_ready(o2)
    r2, _ = ref_forward(gv2, feats2, mask2, params)
    np.testing.assert_allclose(np.asarray(o2), np.asarray(r2), atol=5e-3, rtol=5e-3)

    # 3) Explicit gv_feat path (non-sentinel).
    gv3 = jax.random.normal(jax.random.PRNGKey(7), (B2, EMBED_DIM), jnp.float32)
    o3, _ = dec_block_forward(gv3, feats2, mask2, packed, block_b=8)
    o3 = jax.block_until_ready(o3)
    r3, _ = ref_forward(gv3, feats2, mask2, params)
    np.testing.assert_allclose(np.asarray(o3), np.asarray(r3), atol=5e-3, rtol=5e-3)

    # 4) bf16 storage (weights + att_feats), f32 statistics -- loose parity check.
    packed_bf16 = pack_params(params, dtype=jnp.bfloat16)
    o4, _ = dec_block_forward(gv2, feats2, mask2, packed_bf16, block_b=8)
    o4 = jax.block_until_ready(o4)
    np.testing.assert_allclose(np.asarray(o4), np.asarray(r2), atol=1e-1, rtol=1e-1)

    print("KERNEL_OK")
</pallas_src>

<mosaic_0001>
module attributes {stable_mosaic.version = 11 : i64} {
  func.func @dec_block_kernel(%arg0: i32, %arg1: memref<2x1xf32, #tpu.memory_space<vmem>>, %arg2: memref<2x8x32xf32, #tpu.memory_space<vmem>>, %arg3: memref<2x8xf32, #tpu.memory_space<vmem>>, %arg4: memref<32x128xf32, #tpu.memory_space<vmem>>, %arg5: memref<1x128xf32, #tpu.memory_space<vmem>>, %arg6: memref<1x128xf32, #tpu.memory_space<vmem>>, %arg7: memref<1x128xf32, #tpu.memory_space<vmem>>, %arg8: memref<256x256xf32, #tpu.memory_space<vmem>>, %arg9: memref<2x32x64xf32, #tpu.memory_space<vmem>>, %arg10: memref<2x1x64xf32, #tpu.memory_space<vmem>>, %arg11: memref<2x1x64xf32, #tpu.memory_space<vmem>>, %arg12: memref<2x1x64xf32, #tpu.memory_space<vmem>>, %arg13: memref<128x128xf32, #tpu.memory_space<vmem>>, %arg14: memref<2x32x64xf32, #tpu.memory_space<vmem>>, %arg15: memref<2x1x64xf32, #tpu.memory_space<vmem>>, %arg16: memref<2x64x64xf32, #tpu.memory_space<vmem>>, %arg17: memref<2x1x64xf32, #tpu.memory_space<vmem>>, %arg18: memref<96x32xf32, #tpu.memory_space<vmem>>, %arg19: memref<1x32xf32, #tpu.memory_space<vmem>>, %arg20: memref<1x32xf32, #tpu.memory_space<vmem>>, %arg21: memref<1x32xf32, #tpu.memory_space<vmem>>, %arg22: memref<2x32xf32, #tpu.memory_space<vmem>>) attributes {dimension_semantics = [#tpu.dimension_semantics<parallel>], iteration_bounds = array<i64: 1>, scalar_prefetch = 0 : i64, scratch_operands = 0 : i64, tpu.core_type = #tpu.core_type<tc>, window_params = [{transform_indices = @transform_0, window_bounds = array<i64: 2, 1>}, {transform_indices = @transform_1, window_bounds = array<i64: 2, 8, 32>}, {transform_indices = @transform_2, window_bounds = array<i64: 2, 8>}, {pipeline_mode = #tpu.pipeline_mode<synchronous>, transform_indices = @transform_3, window_bounds = array<i64: 32, 128>}, {pipeline_mode = #tpu.pipeline_mode<synchronous>, transform_indices = @transform_4, window_bounds = array<i64: 1, 128>}, {pipeline_mode = #tpu.pipeline_mode<synchronous>, transform_indices = @transform_5, window_bounds = array<i64: 1, 128>}, {pipeline_mode = #tpu.pipeline_mode<synchronous>, transform_indices = @transform_6, window_bounds = array<i64: 1, 128>}, {pipeline_mode = #tpu.pipeline_mode<synchronous>, transform_indices = @transform_7, window_bounds = array<i64: 256, 256>}, {pipeline_mode = #tpu.pipeline_mode<synchronous>, transform_indices = @transform_8, window_bounds = array<i64: 2, 32, 64>}, {pipeline_mode = #tpu.pipeline_mode<synchronous>, transform_indices = @transform_9, window_bounds = array<i64: 2, 1, 64>}, {pipeline_mode = #tpu.pipeline_mode<synchronous>, transform_indices = @transform_10, window_bounds = array<i64: 2, 1, 64>}, {pipeline_mode = #tpu.pipeline_mode<synchronous>, transform_indices = @transform_11, window_bounds = array<i64: 2, 1, 64>}, {pipeline_mode = #tpu.pipeline_mode<synchronous>, transform_indices = @transform_12, window_bounds = array<i64: 128, 128>}, {pipeline_mode = #tpu.pipeline_mode<synchronous>, transform_indices = @transform_13, window_bounds = array<i64: 2, 32, 64>}, {pipeline_mode = #tpu.pipeline_mode<synchronous>, transform_indices = @transform_14, window_bounds = array<i64: 2, 1, 64>}, {pipeline_mode = #tpu.pipeline_mode<synchronous>, transform_indices = @transform_15, window_bounds = array<i64: 2, 64, 64>}, {pipeline_mode = #tpu.pipeline_mode<synchronous>, transform_indices = @transform_16, window_bounds = array<i64: 2, 1, 64>}, {pipeline_mode = #tpu.pipeline_mode<synchronous>, transform_indices = @transform_17, window_bounds = array<i64: 96, 32>}, {pipeline_mode = #tpu.pipeline_mode<synchronous>, transform_indices = @transform_18, window_bounds = array<i64: 1, 32>}, {pipeline_mode = #tpu.pipeline_mode<synchronous>, transform_indices = @transform_19, window_bounds = array<i64: 1, 32>}, {pipeline_mode = #tpu.pipeline_mode<synchronous>, transform_indices = @transform_20, window_bounds = array<i64: 1, 32>}, {transform_indices = @transform_21, window_bounds = array<i64: 2, 32>}]} {
    %c0 = arith.constant 0 : index
    %c0_0 = arith.constant 0 : index
    %c0_1 = arith.constant 0 : index
    %0 = vector.load %arg2[%c0, %c0_0, %c0_1] : memref<2x8x32xf32, #tpu.memory_space<vmem>>, vector<2x8x32xf32>
    %c0_2 = arith.constant 0 : index
    %c0_3 = arith.constant 0 : index
    %1 = vector.load %arg3[%c0_2, %c0_3] : memref<2x8xf32, #tpu.memory_space<vmem>>, vector<2x8xf32>
    %2 = vector.shape_cast %1 : vector<2x8xf32> to vector<2x8x1xf32>
    %cst = arith.constant dense<0.000000e+00> : vector<2x1xf32>
    %3 = vector.multi_reduction <add>, %2, %cst [1] : vector<2x8x1xf32> to vector<2x1xf32>
    %cst_4 = arith.constant 9.99999997E-7 : f32
    %4 = vector.broadcast %cst_4 : f32 to vector<2x1xf32>
    %5 = arith.maximumf %3, %4 : vector<2x1xf32>
    %6 = tpu.reciprocal %5 {approx = true} : vector<2x1xf32> -> vector<2x1xf32>
    %7 = vector.broadcast %2 : vector<2x8x1xf32> to vector<2x8x32xf32>
    %8 = arith.mulf %0, %7 : vector<2x8x32xf32>
    %cst_5 = arith.constant dense<0.000000e+00> : vector<2x32xf32>
    %9 = vector.multi_reduction <add>, %8, %cst_5 [1] : vector<2x8x32xf32> to vector<2x32xf32>
    %10 = vector.broadcast %6 : vector<2x1xf32> to vector<2x32xf32>
    %11 = arith.mulf %9, %10 : vector<2x32xf32>
    %12 = vector.shape_cast %0 : vector<2x8x32xf32> to vector<16x32xf32>
    %c0_6 = arith.constant 0 : index
    %c0_7 = arith.constant 0 : index
    %13 = vector.load %arg4[%c0_6, %c0_7] : memref<32x128xf32, #tpu.memory_space<vmem>>, vector<32x128xf32>
    %cst_8 = arith.constant dense<0.000000e+00> : vector<16x128xf32>
    %14 = tpu.matmul %12, %13, %cst_8 {dimension_numbers = #tpu.dot_dimension_numbers<[1], [0], [0], [1], [0, 0, 1, 1], [], []>} : vector<16x32xf32>, vector<32x128xf32>, vector<16x128xf32> -> vector<16x128xf32>
    %c0_9 = arith.constant 0 : index
    %c0_10 = arith.constant 0 : index
    %15 = vector.load %arg5[%c0_9, %c0_10] : memref<1x128xf32, #tpu.memory_space<vmem>>, vector<1x128xf32>
    %16 = vector.broadcast %15 : vector<1x128xf32> to vector<16x128xf32>
    %17 = arith.addf %14, %16 : vector<16x128xf32>
    %cst_11 = arith.constant 0.000000e+00 : f32
    %18 = vector.broadcast %cst_11 : f32 to vector<16x128xf32>
    %19 = arith.cmpf ogt, %17, %18 : vector<16x128xf32>
    %cst_12 = arith.constant 1.300000e+00 : f32
    %20 = vector.broadcast %cst_12 : f32 to vector<16x128xf32>
    %21 = arith.divf %17, %20 : vector<16x128xf32>
    %22 = math.exp %21 : vector<16x128xf32>
    %cst_13 = arith.constant 1.000000e+00 : f32
    %23 = vector.broadcast %cst_13 : f32 to vector<16x128xf32>
    %24 = arith.subf %22, %23 : vector<16x128xf32>
    %cst_14 = arith.constant 1.300000e+00 : f32
    %25 = vector.broadcast %cst_14 : f32 to vector<16x128xf32>
    %26 = arith.mulf %25, %24 : vector<16x128xf32>
    %27 = arith.select %19, %17, %26 : vector<16x128xi1>, vector<16x128xf32>
    %c0_15 = arith.constant 0 : index
    %c0_16 = arith.constant 0 : index
    %28 = vector.load %arg6[%c0_15, %c0_16] : memref<1x128xf32, #tpu.memory_space<vmem>>, vector<1x128xf32>
    %c0_17 = arith.constant 0 : index
    %c0_18 = arith.constant 0 : index
    %29 = vector.load %arg7[%c0_17, %c0_18] : memref<1x128xf32, #tpu.memory_space<vmem>>, vector<1x128xf32>
    %c0_19 = arith.constant 0 : index
    %c0_20 = arith.constant 0 : index
    %30 = vector.load %arg8[%c0_19, %c0_20] : memref<256x256xf32, #tpu.memory_space<vmem>>, vector<256x256xf32>
    %31 = arith.mulf %27, %27 : vector<16x128xf32>
    %32 = tpu.concatenate %27, %31 in 1 : vector<16x128xf32>, vector<16x128xf32> -> vector<16x256xf32>
    %cst_21 = arith.constant dense<0.000000e+00> : vector<16x256xf32>
    %33 = tpu.matmul %32, %30, %cst_21 {dimension_numbers = #tpu.dot_dimension_numbers<[1], [0], [0], [1], [0, 0, 1, 1], [], []>} : vector<16x256xf32>, vector<256x256xf32>, vector<16x256xf32> -> vector<16x256xf32>
    %34 = vector.extract_strided_slice %33 {offsets = [0, 0], sizes = [16, 128], strides = [1, 1]} : vector<16x256xf32> to vector<16x128xf32>
    %35 = vector.extract_strided_slice %33 {offsets = [0, 128], sizes = [16, 128], strides = [1, 1]} : vector<16x256xf32> to vector<16x128xf32>
    %36 = arith.mulf %34, %34 : vector<16x128xf32>
    %37 = arith.subf %35, %36 : vector<16x128xf32>
    %cst_22 = arith.constant 0.000000e+00 : f32
    %38 = vector.broadcast %cst_22 : f32 to vector<16x128xf32>
    %39 = arith.maximumf %37, %38 : vector<16x128xf32>
    %40 = arith.subf %27, %34 : vector<16x128xf32>
    %cst_23 = arith.constant 9.99999974E-6 : f32
    %41 = vector.broadcast %cst_23 : f32 to vector<16x128xf32>
    %42 = arith.addf %39, %41 : vector<16x128xf32>
    %43 = math.rsqrt %42 : vector<16x128xf32>
    %44 = arith.mulf %40, %43 : vector<16x128xf32>
    %45 = vector.broadcast %28 : vector<1x128xf32> to vector<16x128xf32>
    %46 = arith.mulf %44, %45 : vector<16x128xf32>
    %47 = vector.broadcast %29 : vector<1x128xf32> to vector<16x128xf32>
    %48 = arith.addf %46, %47 : vector<16x128xf32>
    %49 = vector.shape_cast %48 : vector<16x128xf32> to vector<2x8x128xf32>
    %c0_24 = arith.constant 0 : index
    %c0_25 = arith.constant 0 : index
    %c0_26 = arith.constant 0 : index
    %50 = vector.load %arg9[%c0_24, %c0_25, %c0_26] : memref<2x32x64xf32, #tpu.memory_space<vmem>>, vector<1x32x64xf32>
    %51 = vector.shape_cast %50 : vector<1x32x64xf32> to vector<32x64xf32>
    %cst_27 = arith.constant dense<0.000000e+00> : vector<2x64xf32>
    %52 = tpu.matmul %11, %51, %cst_27 {dimension_numbers = #tpu.dot_dimension_numbers<[1], [0], [0], [1], [0, 0, 1, 1], [], []>} : vector<2x32xf32>, vector<32x64xf32>, vector<2x64xf32> -> vector<2x64xf32>
    %c0_28 = arith.constant 0 : index
    %c0_29 = arith.constant 0 : index
    %c0_30 = arith.constant 0 : index
    %53 = vector.load %arg10[%c0_28, %c0_29, %c0_30] : memref<2x1x64xf32, #tpu.memory_space<vmem>>, vector<1x1x64xf32>
    %54 = vector.shape_cast %53 : vector<1x1x64xf32> to vector<1x64xf32>
    %55 = vector.broadcast %54 : vector<1x64xf32> to vector<2x64xf32>
    %56 = arith.addf %52, %55 : vector<2x64xf32>
    %cst_31 = arith.constant 0.000000e+00 : f32
    %57 = vector.broadcast %cst_31 : f32 to vector<2x64xf32>
    %58 = arith.cmpf ogt, %56, %57 : vector<2x64xf32>
    %cst_32 = arith.constant 1.300000e+00 : f32
    %59 = vector.broadcast %cst_32 : f32 to vector<2x64xf32>
    %60 = arith.divf %56, %59 : vector<2x64xf32>
    %61 = math.exp %60 : vector<2x64xf32>
    %cst_33 = arith.constant 1.000000e+00 : f32
    %62 = vector.broadcast %cst_33 : f32 to vector<2x64xf32>
    %63 = arith.subf %61, %62 : vector<2x64xf32>
    %cst_34 = arith.constant 1.300000e+00 : f32
    %64 = vector.broadcast %cst_34 : f32 to vector<2x64xf32>
    %65 = arith.mulf %64, %63 : vector<2x64xf32>
    %66 = arith.select %58, %56, %65 : vector<2x64xi1>, vector<2x64xf32>
    %c0_35 = arith.constant 0 : index
    %c0_36 = arith.constant 0 : index
    %c0_37 = arith.constant 0 : index
    %67 = vector.load %arg11[%c0_35, %c0_36, %c0_37] : memref<2x1x64xf32, #tpu.memory_space<vmem>>, vector<1x1x64xf32>
    %68 = vector.shape_cast %67 : vector<1x1x64xf32> to vector<1x64xf32>
    %c0_38 = arith.constant 0 : index
    %c0_39 = arith.constant 0 : index
    %c0_40 = arith.constant 0 : index
    %69 = vector.load %arg12[%c0_38, %c0_39, %c0_40] : memref<2x1x64xf32, #tpu.memory_space<vmem>>, vector<1x1x64xf32>
    %70 = vector.shape_cast %69 : vector<1x1x64xf32> to vector<1x64xf32>
    %c0_41 = arith.constant 0 : index
    %c0_42 = arith.constant 0 : index
    %71 = vector.load %arg13[%c0_41, %c0_42] : memref<128x128xf32, #tpu.memory_space<vmem>>, vector<128x128xf32>
    %72 = arith.mulf %66, %66 : vector<2x64xf32>
    %73 = tpu.concatenate %66, %72 in 1 : vector<2x64xf32>, vector<2x64xf32> -> vector<2x128xf32>
    %cst_43 = arith.constant dense<0.000000e+00> : vector<2x128xf32>
    %74 = tpu.matmul %73, %71, %cst_43 {dimension_numbers = #tpu.dot_dimension_numbers<[1], [0], [0], [1], [0, 0, 1, 1], [], []>} : vector<2x128xf32>, vector<128x128xf32>, vector<2x128xf32> -> vector<2x128xf32>
    %75 = vector.extract_strided_slice %74 {offsets = [0, 0], sizes = [2, 64], strides = [1, 1]} : vector<2x128xf32> to vector<2x64xf32>
    %76 = vector.extract_strided_slice %74 {offsets = [0, 64], sizes = [2, 64], strides = [1, 1]} : vector<2x128xf32> to vector<2x64xf32>
    %77 = arith.mulf %75, %75 : vector<2x64xf32>
    %78 = arith.subf %76, %77 : vector<2x64xf32>
    %cst_44 = arith.constant 0.000000e+00 : f32
    %79 = vector.broadcast %cst_44 : f32 to vector<2x64xf32>
    %80 = arith.maximumf %78, %79 : vector<2x64xf32>
    %81 = arith.subf %66, %75 : vector<2x64xf32>
    %cst_45 = arith.constant 9.99999974E-6 : f32
    %82 = vector.broadcast %cst_45 : f32 to vector<2x64xf32>
    %83 = arith.addf %80, %82 : vector<2x64xf32>
    %84 = math.rsqrt %83 : vector<2x64xf32>
    %85 = arith.mulf %81, %84 : vector<2x64xf32>
    %86 = vector.broadcast %68 : vector<1x64xf32> to vector<2x64xf32>
    %87 = arith.mulf %85, %86 : vector<2x64xf32>
    %88 = vector.broadcast %70 : vector<1x64xf32> to vector<2x64xf32>
    %89 = arith.addf %87, %88 : vector<2x64xf32>
    %90 = vector.extract_strided_slice %89 {offsets = [0, 0], sizes = [2, 32], strides = [1, 1]} : vector<2x64xf32> to vector<2x32xf32>
    %91 = vector.extract_strided_slice %89 {offsets = [0, 32], sizes = [2, 32], strides = [1, 1]} : vector<2x64xf32> to vector<2x32xf32>
    %92 = vector.extract_strided_slice %49 {offsets = [0, 0, 0], sizes = [2, 8, 32], strides = [1, 1, 1]} : vector<2x8x128xf32> to vector<2x8x32xf32>
    %93 = vector.extract_strided_slice %49 {offsets = [0, 0, 32], sizes = [2, 8, 32], strides = [1, 1, 1]} : vector<2x8x128xf32> to vector<2x8x32xf32>
    %94 = vector.shape_cast %90 : vector<2x32xf32> to vector<2x1x32xf32>
    %95 = vector.broadcast %94 : vector<2x1x32xf32> to vector<2x8x32xf32>
    %96 = arith.mulf %95, %92 : vector<2x8x32xf32>
    %97 = vector.shape_cast %96 : vector<2x8x32xf32> to vector<16x32xf32>
    %c0_46 = arith.constant 0 : index
    %c0_47 = arith.constant 0 : index
    %c0_48 = arith.constant 0 : index
    %98 = vector.load %arg14[%c0_46, %c0_47, %c0_48] : memref<2x32x64xf32, #tpu.memory_space<vmem>>, vector<1x32x64xf32>
    %99 = vector.shape_cast %98 : vector<1x32x64xf32> to vector<32x64xf32>
    %cst_49 = arith.constant dense<0.000000e+00> : vector<16x64xf32>
    %100 = tpu.matmul %97, %99, %cst_49 {dimension_numbers = #tpu.dot_dimension_numbers<[1], [0], [0], [1], [0, 0, 1, 1], [], []>} : vector<16x32xf32>, vector<32x64xf32>, vector<16x64xf32> -> vector<16x64xf32>
    %c0_50 = arith.constant 0 : index
    %c0_51 = arith.constant 0 : index
    %c0_52 = arith.constant 0 : index
    %101 = vector.load %arg15[%c0_50, %c0_51, %c0_52] : memref<2x1x64xf32, #tpu.memory_space<vmem>>, vector<1x1x64xf32>
    %102 = vector.shape_cast %101 : vector<1x1x64xf32> to vector<1x64xf32>
    %103 = vector.broadcast %102 : vector<1x64xf32> to vector<16x64xf32>
    %104 = arith.addf %100, %103 : vector<16x64xf32>
    %cst_53 = arith.constant 0.000000e+00 : f32
    %105 = vector.broadcast %cst_53 : f32 to vector<16x64xf32>
    %106 = arith.maximumf %104, %105 : vector<16x64xf32>
    %c0_54 = arith.constant 0 : index
    %c0_55 = arith.constant 0 : index
    %c0_56 = arith.constant 0 : index
    %107 = vector.load %arg16[%c0_54, %c0_55, %c0_56] : memref<2x64x64xf32, #tpu.memory_space<vmem>>, vector<1x64x64xf32>
    %108 = vector.shape_cast %107 : vector<1x64x64xf32> to vector<64x64xf32>
    %cst_57 = arith.constant dense<0.000000e+00> : vector<16x64xf32>
    %109 = tpu.matmul %106, %108, %cst_57 {dimension_numbers = #tpu.dot_dimension_numbers<[1], [0], [0], [1], [0, 0, 1, 1], [], []>} : vector<16x64xf32>, vector<64x64xf32>, vector<16x64xf32> -> vector<16x64xf32>
    %c0_58 = arith.constant 0 : index
    %c0_59 = arith.constant 0 : index
    %c0_60 = arith.constant 0 : index
    %110 = vector.load %arg17[%c0_58, %c0_59, %c0_60] : memref<2x1x64xf32, #tpu.memory_space<vmem>>, vector<1x1x64xf32>
    %111 = vector.shape_cast %110 : vector<1x1x64xf32> to vector<1x64xf32>
    %112 = vector.broadcast %111 : vector<1x64xf32> to vector<16x64xf32>
    %113 = arith.addf %109, %112 : vector<16x64xf32>
    %114 = vector.shape_cast %106 : vector<16x64xf32> to vector<2x8x64xf32>
    %115 = vector.broadcast %2 : vector<2x8x1xf32> to vector<2x8x64xf32>
    %116 = arith.mulf %114, %115 : vector<2x8x64xf32>
    %cst_61 = arith.constant dense<0.000000e+00> : vector<2x64xf32>
    %117 = vector.multi_reduction <add>, %116, %cst_61 [1] : vector<2x8x64xf32> to vector<2x64xf32>
    %118 = vector.broadcast %6 : vector<2x1xf32> to vector<2x64xf32>
    %119 = arith.mulf %117, %118 : vector<2x64xf32>
    %c0_62 = arith.constant 0 : index
    %c0_63 = arith.constant 0 : index
    %c0_64 = arith.constant 0 : index
    %120 = vector.load %arg16[%c0_62, %c0_63, %c0_64] : memref<2x64x64xf32, #tpu.memory_space<vmem>>, vector<1x64x64xf32>
    %121 = vector.shape_cast %120 : vector<1x64x64xf32> to vector<64x64xf32>
    %cst_65 = arith.constant dense<0.000000e+00> : vector<2x64xf32>
    %122 = tpu.matmul %119, %121, %cst_65 {dimension_numbers = #tpu.dot_dimension_numbers<[1], [0], [0], [1], [0, 0, 1, 1], [], []>} : vector<2x64xf32>, vector<64x64xf32>, vector<2x64xf32> -> vector<2x64xf32>
    %c0_66 = arith.constant 0 : index
    %c0_67 = arith.constant 0 : index
    %c0_68 = arith.constant 0 : index
    %123 = vector.load %arg17[%c0_66, %c0_67, %c0_68] : memref<2x1x64xf32, #tpu.memory_space<vmem>>, vector<1x1x64xf32>
    %124 = vector.shape_cast %123 : vector<1x1x64xf32> to vector<1x64xf32>
    %125 = vector.broadcast %124 : vector<1x64xf32> to vector<2x64xf32>
    %126 = arith.addf %122, %125 : vector<2x64xf32>
    %127 = vector.extract_strided_slice %126 {offsets = [0, 32], sizes = [2, 32], strides = [1, 1]} : vector<2x64xf32> to vector<2x32xf32>
    %128 = arith.negf %127 : vector<2x32xf32>
    %129 = math.exp %128 : vector<2x32xf32>
    %cst_69 = arith.constant 1.000000e+00 : f32
    %130 = vector.broadcast %cst_69 : f32 to vector<2x32xf32>
    %131 = arith.addf %130, %129 : vector<2x32xf32>
    %132 = arith.divf %130, %131 : vector<2x32xf32>
    %133 = vector.extract_strided_slice %113 {offsets = [0, 0], sizes = [16, 32], strides = [1, 1]} : vector<16x64xf32> to vector<16x32xf32>
    %134 = vector.shape_cast %133 : vector<16x32xf32> to vector<2x8x32xf32>
    %cst_70 = arith.constant 0.000000e+00 : f32
    %135 = vector.broadcast %cst_70 : f32 to vector<2x8x1xf32>
    %136 = arith.cmpf oeq, %2, %135 : vector<2x8x1xf32>
    %cst_71 = arith.constant -1.000000e+09 : f32
    %137 = vector.shape_cast %136 : vector<2x8x1xi1> to vector<2x8x1xi1>
    %138 = vector.broadcast %137 : vector<2x8x1xi1> to vector<2x8x32xi1>
    %139 = vector.broadcast %cst_71 : f32 to vector<2x8x32xf32>
    %140 = arith.select %138, %139, %134 : vector<2x8x32xi1>, vector<2x8x32xf32>
    %cst_72 = arith.constant dense<0xFF800000> : vector<2x32xf32>
    %141 = vector.multi_reduction <maximumf>, %140, %cst_72 [1] : vector<2x8x32xf32> to vector<2x32xf32>
    %142 = vector.shape_cast %141 : vector<2x32xf32> to vector<2x1x32xf32>
    %143 = vector.broadcast %142 : vector<2x1x32xf32> to vector<2x8x32xf32>
    %144 = arith.subf %140, %143 : vector<2x8x32xf32>
    %145 = math.exp %144 : vector<2x8x32xf32>
    %cst_73 = arith.constant dense<0.000000e+00> : vector<2x32xf32>
    %146 = vector.multi_reduction <add>, %145, %cst_73 [1] : vector<2x8x32xf32> to vector<2x32xf32>
    %147 = vector.shape_cast %146 : vector<2x32xf32> to vector<2x1x32xf32>
    %148 = vector.broadcast %147 : vector<2x1x32xf32> to vector<2x8x32xf32>
    %149 = arith.divf %145, %148 : vector<2x8x32xf32>
    %150 = arith.mulf %149, %93 : vector<2x8x32xf32>
    %cst_74 = arith.constant dense<0.000000e+00> : vector<2x32xf32>
    %151 = vector.multi_reduction <add>, %150, %cst_74 [1] : vector<2x8x32xf32> to vector<2x32xf32>
    %152 = arith.mulf %91, %151 : vector<2x32xf32>
    %153 = arith.mulf %152, %132 : vector<2x32xf32>
    %c1 = arith.constant 1 : index
    %c0_75 = arith.constant 0 : index
    %c0_76 = arith.constant 0 : index
    %154 = vector.load %arg9[%c1, %c0_75, %c0_76] : memref<2x32x64xf32, #tpu.memory_space<vmem>>, vector<1x32x64xf32>
    %155 = vector.shape_cast %154 : vector<1x32x64xf32> to vector<32x64xf32>
    %cst_77 = arith.constant dense<0.000000e+00> : vector<2x64xf32>
    %156 = tpu.matmul %153, %155, %cst_77 {dimension_numbers = #tpu.dot_dimension_numbers<[1], [0], [0], [1], [0, 0, 1, 1], [], []>} : vector<2x32xf32>, vector<32x64xf32>, vector<2x64xf32> -> vector<2x64xf32>
    %c1_78 = arith.constant 1 : index
    %c0_79 = arith.constant 0 : index
    %c0_80 = arith.constant 0 : index
    %157 = vector.load %arg10[%c1_78, %c0_79, %c0_80] : memref<2x1x64xf32, #tpu.memory_space<vmem>>, vector<1x1x64xf32>
    %158 = vector.shape_cast %157 : vector<1x1x64xf32> to vector<1x64xf32>
    %159 = vector.broadcast %158 : vector<1x64xf32> to vector<2x64xf32>
    %160 = arith.addf %156, %159 : vector<2x64xf32>
    %cst_81 = arith.constant 0.000000e+00 : f32
    %161 = vector.broadcast %cst_81 : f32 to vector<2x64xf32>
    %162 = arith.cmpf ogt, %160, %161 : vector<2x64xf32>
    %cst_82 = arith.constant 1.300000e+00 : f32
    %163 = vector.broadcast %cst_82 : f32 to vector<2x64xf32>
    %164 = arith.divf %160, %163 : vector<2x64xf32>
    %165 = math.exp %164 : vector<2x64xf32>
    %cst_83 = arith.constant 1.000000e+00 : f32
    %166 = vector.broadcast %cst_83 : f32 to vector<2x64xf32>
    %167 = arith.subf %165, %166 : vector<2x64xf32>
    %cst_84 = arith.constant 1.300000e+00 : f32
    %168 = vector.broadcast %cst_84 : f32 to vector<2x64xf32>
    %169 = arith.mulf %168, %167 : vector<2x64xf32>
    %170 = arith.select %162, %160, %169 : vector<2x64xi1>, vector<2x64xf32>
    %c1_85 = arith.constant 1 : index
    %c0_86 = arith.constant 0 : index
    %c0_87 = arith.constant 0 : index
    %171 = vector.load %arg11[%c1_85, %c0_86, %c0_87] : memref<2x1x64xf32, #tpu.memory_space<vmem>>, vector<1x1x64xf32>
    %172 = vector.shape_cast %171 : vector<1x1x64xf32> to vector<1x64xf32>
    %c1_88 = arith.constant 1 : index
    %c0_89 = arith.constant 0 : index
    %c0_90 = arith.constant 0 : index
    %173 = vector.load %arg12[%c1_88, %c0_89, %c0_90] : memref<2x1x64xf32, #tpu.memory_space<vmem>>, vector<1x1x64xf32>
    %174 = vector.shape_cast %173 : vector<1x1x64xf32> to vector<1x64xf32>
    %c0_91 = arith.constant 0 : index
    %c0_92 = arith.constant 0 : index
    %175 = vector.load %arg13[%c0_91, %c0_92] : memref<128x128xf32, #tpu.memory_space<vmem>>, vector<128x128xf32>
    %176 = arith.mulf %170, %170 : vector<2x64xf32>
    %177 = tpu.concatenate %170, %176 in 1 : vector<2x64xf32>, vector<2x64xf32> -> vector<2x128xf32>
    %cst_93 = arith.constant dense<0.000000e+00> : vector<2x128xf32>
    %178 = tpu.matmul %177, %175, %cst_93 {dimension_numbers = #tpu.dot_dimension_numbers<[1], [0], [0], [1], [0, 0, 1, 1], [], []>} : vector<2x128xf32>, vector<128x128xf32>, vector<2x128xf32> -> vector<2x128xf32>
    %179 = vector.extract_strided_slice %178 {offsets = [0, 0], sizes = [2, 64], strides = [1, 1]} : vector<2x128xf32> to vector<2x64xf32>
    %180 = vector.extract_strided_slice %178 {offsets = [0, 64], sizes = [2, 64], strides = [1, 1]} : vector<2x128xf32> to vector<2x64xf32>
    %181 = arith.mulf %179, %179 : vector<2x64xf32>
    %182 = arith.subf %180, %181 : vector<2x64xf32>
    %cst_94 = arith.constant 0.000000e+00 : f32
    %183 = vector.broadcast %cst_94 : f32 to vector<2x64xf32>
    %184 = arith.maximumf %182, %183 : vector<2x64xf32>
    %185 = arith.subf %170, %179 : vector<2x64xf32>
    %cst_95 = arith.constant 9.99999974E-6 : f32
    %186 = vector.broadcast %cst_95 : f32 to vector<2x64xf32>
    %187 = arith.addf %184, %186 : vector<2x64xf32>
    %188 = math.rsqrt %187 : vector<2x64xf32>
    %189 = arith.mulf %185, %188 : vector<2x64xf32>
    %190 = vector.broadcast %172 : vector<1x64xf32> to vector<2x64xf32>
    %191 = arith.mulf %189, %190 : vector<2x64xf32>
    %192 = vector.broadcast %174 : vector<1x64xf32> to vector<2x64xf32>
    %193 = arith.addf %191, %192 : vector<2x64xf32>
    %194 = vector.extract_strided_slice %193 {offsets = [0, 0], sizes = [2, 32], strides = [1, 1]} : vector<2x64xf32> to vector<2x32xf32>
    %195 = vector.extract_strided_slice %193 {offsets = [0, 32], sizes = [2, 32], strides = [1, 1]} : vector<2x64xf32> to vector<2x32xf32>
    %196 = vector.extract_strided_slice %49 {offsets = [0, 0, 64], sizes = [2, 8, 32], strides = [1, 1, 1]} : vector<2x8x128xf32> to vector<2x8x32xf32>
    %197 = vector.extract_strided_slice %49 {offsets = [0, 0, 96], sizes = [2, 8, 32], strides = [1, 1, 1]} : vector<2x8x128xf32> to vector<2x8x32xf32>
    %198 = vector.shape_cast %194 : vector<2x32xf32> to vector<2x1x32xf32>
    %199 = vector.broadcast %198 : vector<2x1x32xf32> to vector<2x8x32xf32>
    %200 = arith.mulf %199, %196 : vector<2x8x32xf32>
    %201 = vector.shape_cast %200 : vector<2x8x32xf32> to vector<16x32xf32>
    %c1_96 = arith.constant 1 : index
    %c0_97 = arith.constant 0 : index
    %c0_98 = arith.constant 0 : index
    %202 = vector.load %arg14[%c1_96, %c0_97, %c0_98] : memref<2x32x64xf32, #tpu.memory_space<vmem>>, vector<1x32x64xf32>
    %203 = vector.shape_cast %202 : vector<1x32x64xf32> to vector<32x64xf32>
    %cst_99 = arith.constant dense<0.000000e+00> : vector<16x64xf32>
    %204 = tpu.matmul %201, %203, %cst_99 {dimension_numbers = #tpu.dot_dimension_numbers<[1], [0], [0], [1], [0, 0, 1, 1], [], []>} : vector<16x32xf32>, vector<32x64xf32>, vector<16x64xf32> -> vector<16x64xf32>
    %c1_100 = arith.constant 1 : index
    %c0_101 = arith.constant 0 : index
    %c0_102 = arith.constant 0 : index
    %205 = vector.load %arg15[%c1_100, %c0_101, %c0_102] : memref<2x1x64xf32, #tpu.memory_space<vmem>>, vector<1x1x64xf32>
    %206 = vector.shape_cast %205 : vector<1x1x64xf32> to vector<1x64xf32>
    %207 = vector.broadcast %206 : vector<1x64xf32> to vector<16x64xf32>
    %208 = arith.addf %204, %207 : vector<16x64xf32>
    %cst_103 = arith.constant 0.000000e+00 : f32
    %209 = vector.broadcast %cst_103 : f32 to vector<16x64xf32>
    %210 = arith.maximumf %208, %209 : vector<16x64xf32>
    %c1_104 = arith.constant 1 : index
    %c0_105 = arith.constant 0 : index
    %c0_106 = arith.constant 0 : index
    %211 = vector.load %arg16[%c1_104, %c0_105, %c0_106] : memref<2x64x64xf32, #tpu.memory_space<vmem>>, vector<1x64x64xf32>
    %212 = vector.shape_cast %211 : vector<1x64x64xf32> to vector<64x64xf32>
    %cst_107 = arith.constant dense<0.000000e+00> : vector<16x64xf32>
    %213 = tpu.matmul %210, %212, %cst_107 {dimension_numbers = #tpu.dot_dimension_numbers<[1], [0], [0], [1], [0, 0, 1, 1], [], []>} : vector<16x64xf32>, vector<64x64xf32>, vector<16x64xf32> -> vector<16x64xf32>
    %c1_108 = arith.constant 1 : index
    %c0_109 = arith.constant 0 : index
    %c0_110 = arith.constant 0 : index
    %214 = vector.load %arg17[%c1_108, %c0_109, %c0_110] : memref<2x1x64xf32, #tpu.memory_space<vmem>>, vector<1x1x64xf32>
    %215 = vector.shape_cast %214 : vector<1x1x64xf32> to vector<1x64xf32>
    %216 = vector.broadcast %215 : vector<1x64xf32> to vector<16x64xf32>
    %217 = arith.addf %213, %216 : vector<16x64xf32>
    %218 = vector.shape_cast %210 : vector<16x64xf32> to vector<2x8x64xf32>
    %219 = vector.broadcast %2 : vector<2x8x1xf32> to vector<2x8x64xf32>
    %220 = arith.mulf %218, %219 : vector<2x8x64xf32>
    %cst_111 = arith.constant dense<0.000000e+00> : vector<2x64xf32>
    %221 = vector.multi_reduction <add>, %220, %cst_111 [1] : vector<2x8x64xf32> to vector<2x64xf32>
    %222 = vector.broadcast %6 : vector<2x1xf32> to vector<2x64xf32>
    %223 = arith.mulf %221, %222 : vector<2x64xf32>
    %c1_112 = arith.constant 1 : index
    %c0_113 = arith.constant 0 : index
    %c0_114 = arith.constant 0 : index
    %224 = vector.load %arg16[%c1_112, %c0_113, %c0_114] : memref<2x64x64xf32, #tpu.memory_space<vmem>>, vector<1x64x64xf32>
    %225 = vector.shape_cast %224 : vector<1x64x64xf32> to vector<64x64xf32>
    %cst_115 = arith.constant dense<0.000000e+00> : vector<2x64xf32>
    %226 = tpu.matmul %223, %225, %cst_115 {dimension_numbers = #tpu.dot_dimension_numbers<[1], [0], [0], [1], [0, 0, 1, 1], [], []>} : vector<2x64xf32>, vector<64x64xf32>, vector<2x64xf32> -> vector<2x64xf32>
    %c1_116 = arith.constant 1 : index
    %c0_117 = arith.constant 0 : index
    %c0_118 = arith.constant 0 : index
    %227 = vector.load %arg17[%c1_116, %c0_117, %c0_118] : memref<2x1x64xf32, #tpu.memory_space<vmem>>, vector<1x1x64xf32>
    %228 = vector.shape_cast %227 : vector<1x1x64xf32> to vector<1x64xf32>
    %229 = vector.broadcast %228 : vector<1x64xf32> to vector<2x64xf32>
    %230 = arith.addf %226, %229 : vector<2x64xf32>
    %231 = vector.extract_strided_slice %230 {offsets = [0, 32], sizes = [2, 32], strides = [1, 1]} : vector<2x64xf32> to vector<2x32xf32>
    %232 = arith.negf %231 : vector<2x32xf32>
    %233 = math.exp %232 : vector<2x32xf32>
    %cst_119 = arith.constant 1.000000e+00 : f32
    %234 = vector.broadcast %cst_119 : f32 to vector<2x32xf32>
    %235 = arith.addf %234, %233 : vector<2x32xf32>
    %236 = arith.divf %234, %235 : vector<2x32xf32>
    %237 = vector.extract_strided_slice %217 {offsets = [0, 0], sizes = [16, 32], strides = [1, 1]} : vector<16x64xf32> to vector<16x32xf32>
    %238 = vector.shape_cast %237 : vector<16x32xf32> to vector<2x8x32xf32>
    %cst_120 = arith.constant 0.000000e+00 : f32
    %239 = vector.broadcast %cst_120 : f32 to vector<2x8x1xf32>
    %240 = arith.cmpf oeq, %2, %239 : vector<2x8x1xf32>
    %cst_121 = arith.constant -1.000000e+09 : f32
    %241 = vector.shape_cast %240 : vector<2x8x1xi1> to vector<2x8x1xi1>
    %242 = vector.broadcast %241 : vector<2x8x1xi1> to vector<2x8x32xi1>
    %243 = vector.broadcast %cst_121 : f32 to vector<2x8x32xf32>
    %244 = arith.select %242, %243, %238 : vector<2x8x32xi1>, vector<2x8x32xf32>
    %cst_122 = arith.constant dense<0xFF800000> : vector<2x32xf32>
    %245 = vector.multi_reduction <maximumf>, %244, %cst_122 [1] : vector<2x8x32xf32> to vector<2x32xf32>
    %246 = vector.shape_cast %245 : vector<2x32xf32> to vector<2x1x32xf32>
    %247 = vector.broadcast %246 : vector<2x1x32xf32> to vector<2x8x32xf32>
    %248 = arith.subf %244, %247 : vector<2x8x32xf32>
    %249 = math.exp %248 : vector<2x8x32xf32>
    %cst_123 = arith.constant dense<0.000000e+00> : vector<2x32xf32>
    %250 = vector.multi_reduction <add>, %249, %cst_123 [1] : vector<2x8x32xf32> to vector<2x32xf32>
    %251 = vector.shape_cast %250 : vector<2x32xf32> to vector<2x1x32xf32>
    %252 = vector.broadcast %251 : vector<2x1x32xf32> to vector<2x8x32xf32>
    %253 = arith.divf %249, %252 : vector<2x8x32xf32>
    %254 = arith.mulf %253, %197 : vector<2x8x32xf32>
    %cst_124 = arith.constant dense<0.000000e+00> : vector<2x32xf32>
    %255 = vector.multi_reduction <add>, %254, %cst_124 [1] : vector<2x8x32xf32> to vector<2x32xf32>
    %256 = arith.mulf %195, %255 : vector<2x32xf32>
    %257 = arith.mulf %256, %236 : vector<2x32xf32>
    %258 = tpu.concatenate %11, %153, %257 in 1 : vector<2x32xf32>, vector<2x32xf32>, vector<2x32xf32> -> vector<2x96xf32>
    %c0_125 = arith.constant 0 : index
    %c0_126 = arith.constant 0 : index
    %259 = vector.load %arg18[%c0_125, %c0_126] : memref<96x32xf32, #tpu.memory_space<vmem>>, vector<96x32xf32>
    %cst_127 = arith.constant dense<0.000000e+00> : vector<2x32xf32>
    %260 = tpu.matmul %258, %259, %cst_127 {dimension_numbers = #tpu.dot_dimension_numbers<[1], [0], [0], [1], [0, 0, 1, 1], [], []>} : vector<2x96xf32>, vector<96x32xf32>, vector<2x32xf32> -> vector<2x32xf32>
    %c0_128 = arith.constant 0 : index
    %c0_129 = arith.constant 0 : index
    %261 = vector.load %arg19[%c0_128, %c0_129] : memref<1x32xf32, #tpu.memory_space<vmem>>, vector<1x32xf32>
    %262 = vector.broadcast %261 : vector<1x32xf32> to vector<2x32xf32>
    %263 = arith.addf %260, %262 : vector<2x32xf32>
    %cst_130 = arith.constant dense<0.000000e+00> : vector<2xf32>
    %264 = vector.multi_reduction <add>, %263, %cst_130 [1] : vector<2x32xf32> to vector<2xf32>
    %265 = vector.shape_cast %264 : vector<2xf32> to vector<2x1xf32>
    %cst_131 = arith.constant 3.200000e+01 : f32
    %266 = vector.broadcast %cst_131 : f32 to vector<2x1xf32>
    %267 = arith.divf %265, %266 : vector<2x1xf32>
    %268 = vector.broadcast %267 : vector<2x1xf32> to vector<2x32xf32>
    %269 = arith.subf %263, %268 : vector<2x32xf32>
    %270 = arith.mulf %269, %269 : vector<2x32xf32>
    %cst_132 = arith.constant dense<0.000000e+00> : vector<2xf32>
    %271 = vector.multi_reduction <add>, %270, %cst_132 [1] : vector<2x32xf32> to vector<2xf32>
    %272 = vector.shape_cast %271 : vector<2xf32> to vector<2x1xf32>
    %cst_133 = arith.constant 3.200000e+01 : f32
    %273 = vector.broadcast %cst_133 : f32 to vector<2x1xf32>
    %274 = arith.divf %272, %273 : vector<2x1xf32>
    %275 = vector.broadcast %267 : vector<2x1xf32> to vector<2x32xf32>
    %276 = arith.subf %263, %275 : vector<2x32xf32>
    %cst_134 = arith.constant 9.99999974E-6 : f32
    %277 = vector.broadcast %cst_134 : f32 to vector<2x1xf32>
    %278 = arith.addf %274, %277 : vector<2x1xf32>
    %279 = math.rsqrt %278 : vector<2x1xf32>
    %280 = vector.broadcast %279 : vector<2x1xf32> to vector<2x32xf32>
    %281 = arith.mulf %276, %280 : vector<2x32xf32>
    %c0_135 = arith.constant 0 : index
    %c0_136 = arith.constant 0 : index
    %282 = vector.load %arg20[%c0_135, %c0_136] : memref<1x32xf32, #tpu.memory_space<vmem>>, vector<1x32xf32>
    %283 = vector.broadcast %282 : vector<1x32xf32> to vector<2x32xf32>
    %284 = arith.mulf %281, %283 : vector<2x32xf32>
    %c0_137 = arith.constant 0 : index
    %c0_138 = arith.constant 0 : index
    %285 = vector.load %arg21[%c0_137, %c0_138] : memref<1x32xf32, #tpu.memory_space<vmem>>, vector<1x32xf32>
    %286 = vector.broadcast %285 : vector<1x32xf32> to vector<2x32xf32>
    %287 = arith.addf %284, %286 : vector<2x32xf32>
    %c0_139 = arith.constant 0 : index
    %c0_140 = arith.constant 0 : index
    %288 = vector.load %arg22[%c0_139, %c0_140] : memref<2x32xf32, #tpu.memory_space<vmem>>, vector<2x32xf32>
    tpu.vector_store %arg22[%c0_139, %c0_140], %287 {strides = array<i32>} : memref<2x32xf32, #tpu.memory_space<vmem>>, vector<2x32xf32>,
    return
  }
  func.func @transform_0(%arg0: i32) -> (i32, i32) {
    %c0_i32 = arith.constant 0 : i32
    %c0_i32_0 = arith.constant 0 : i32
    return %arg0, %c0_i32 : i32, i32
  }
  func.func @transform_1(%arg0: i32) -> (i32, i32, i32) {
    %c0_i32 = arith.constant 0 : i32
    %c0_i32_0 = arith.constant 0 : i32
    %c0_i32_1 = arith.constant 0 : i32
    return %arg0, %c0_i32, %c0_i32_0 : i32, i32, i32
  }
  func.func @transform_2(%arg0: i32) -> (i32, i32) {
    %c0_i32 = arith.constant 0 : i32
    %c0_i32_0 = arith.constant 0 : i32
    return %arg0, %c0_i32 : i32, i32
  }
  func.func @transform_3(%arg0: i32) -> (i32, i32) {
    %c0_i32 = arith.constant 0 : i32
    %c0_i32_0 = arith.constant 0 : i32
    %c0_i32_1 = arith.constant 0 : i32
    return %c0_i32, %c0_i32_0 : i32, i32
  }
  func.func @transform_4(%arg0: i32) -> (i32, i32) {
    %c0_i32 = arith.constant 0 : i32
    %c0_i32_0 = arith.constant 0 : i32
    %c0_i32_1 = arith.constant 0 : i32
    return %c0_i32, %c0_i32_0 : i32, i32
  }
  func.func @transform_5(%arg0: i32) -> (i32, i32) {
    %c0_i32 = arith.constant 0 : i32
    %c0_i32_0 = arith.constant 0 : i32
    %c0_i32_1 = arith.constant 0 : i32
    return %c0_i32, %c0_i32_0 : i32, i32
  }
  func.func @transform_6(%arg0: i32) -> (i32, i32) {
    %c0_i32 = arith.constant 0 : i32
    %c0_i32_0 = arith.constant 0 : i32
    %c0_i32_1 = arith.constant 0 : i32
    return %c0_i32, %c0_i32_0 : i32, i32
  }
  func.func @transform_7(%arg0: i32) -> (i32, i32) {
    %c0_i32 = arith.constant 0 : i32
    %c0_i32_0 = arith.constant 0 : i32
    %c0_i32_1 = arith.constant 0 : i32
    return %c0_i32, %c0_i32_0 : i32, i32
  }
  func.func @transform_8(%arg0: i32) -> (i32, i32, i32) {
    %c0_i32 = arith.constant 0 : i32
    %c0_i32_0 = arith.constant 0 : i32
    %c0_i32_1 = arith.constant 0 : i32
    %c0_i32_2 = arith.constant 0 : i32
    return %c0_i32, %c0_i32_0, %c0_i32_1 : i32, i32, i32
  }
  func.func @transform_9(%arg0: i32) -> (i32, i32, i32) {
    %c0_i32 = arith.constant 0 : i32
    %c0_i32_0 = arith.constant 0 : i32
    %c0_i32_1 = arith.constant 0 : i32
    %c0_i32_2 = arith.constant 0 : i32
    return %c0_i32, %c0_i32_0, %c0_i32_1 : i32, i32, i32
  }
  func.func @transform_10(%arg0: i32) -> (i32, i32, i32) {
    %c0_i32 = arith.constant 0 : i32
    %c0_i32_0 = arith.constant 0 : i32
    %c0_i32_1 = arith.constant 0 : i32
    %c0_i32_2 = arith.constant 0 : i32
    return %c0_i32, %c0_i32_0, %c0_i32_1 : i32, i32, i32
  }
  func.func @transform_11(%arg0: i32) -> (i32, i32, i32) {
    %c0_i32 = arith.constant 0 : i32
    %c0_i32_0 = arith.constant 0 : i32
    %c0_i32_1 = arith.constant 0 : i32
    %c0_i32_2 = arith.constant 0 : i32
    return %c0_i32, %c0_i32_0, %c0_i32_1 : i32, i32, i32
  }
  func.func @transform_12(%arg0: i32) -> (i32, i32) {
    %c0_i32 = arith.constant 0 : i32
    %c0_i32_0 = arith.constant 0 : i32
    %c0_i32_1 = arith.constant 0 : i32
    return %c0_i32, %c0_i32_0 : i32, i32
  }
  func.func @transform_13(%arg0: i32) -> (i32, i32, i32) {
    %c0_i32 = arith.constant 0 : i32
    %c0_i32_0 = arith.constant 0 : i32
    %c0_i32_1 = arith.constant 0 : i32
    %c0_i32_2 = arith.constant 0 : i32
    return %c0_i32, %c0_i32_0, %c0_i32_1 : i32, i32, i32
  }
  func.func @transform_14(%arg0: i32) -> (i32, i32, i32) {
    %c0_i32 = arith.constant 0 : i32
    %c0_i32_0 = arith.constant 0 : i32
    %c0_i32_1 = arith.constant 0 : i32
    %c0_i32_2 = arith.constant 0 : i32
    return %c0_i32, %c0_i32_0, %c0_i32_1 : i32, i32, i32
  }
  func.func @transform_15(%arg0: i32) -> (i32, i32, i32) {
    %c0_i32 = arith.constant 0 : i32
    %c0_i32_0 = arith.constant 0 : i32
    %c0_i32_1 = arith.constant 0 : i32
    %c0_i32_2 = arith.constant 0 : i32
    return %c0_i32, %c0_i32_0, %c0_i32_1 : i32, i32, i32
  }
  func.func @transform_16(%arg0: i32) -> (i32, i32, i32) {
    %c0_i32 = arith.constant 0 : i32
    %c0_i32_0 = arith.constant 0 : i32
    %c0_i32_1 = arith.constant 0 : i32
    %c0_i32_2 = arith.constant 0 : i32
    return %c0_i32, %c0_i32_0, %c0_i32_1 : i32, i32, i32
  }
  func.func @transform_17(%arg0: i32) -> (i32, i32) {
    %c0_i32 = arith.constant 0 : i32
    %c0_i32_0 = arith.constant 0 : i32
    %c0_i32_1 = arith.constant 0 : i32
    return %c0_i32, %c0_i32_0 : i32, i32
  }
  func.func @transform_18(%arg0: i32) -> (i32, i32) {
    %c0_i32 = arith.constant 0 : i32
    %c0_i32_0 = arith.constant 0 : i32
    %c0_i32_1 = arith.constant 0 : i32
    return %c0_i32, %c0_i32_0 : i32, i32
  }
  func.func @transform_19(%arg0: i32) -> (i32, i32) {
    %c0_i32 = arith.constant 0 : i32
    %c0_i32_0 = arith.constant 0 : i32
    %c0_i32_1 = arith.constant 0 : i32
    return %c0_i32, %c0_i32_0 : i32, i32
  }
  func.func @transform_20(%arg0: i32) -> (i32, i32) {
    %c0_i32 = arith.constant 0 : i32
    %c0_i32_0 = arith.constant 0 : i32
    %c0_i32_1 = arith.constant 0 : i32
    return %c0_i32, %c0_i32_0 : i32, i32
  }
  func.func @transform_21(%arg0: i32) -> (i32, i32) {
    %c0_i32 = arith.constant 0 : i32
    %c0_i32_0 = arith.constant 0 : i32
    return %arg0, %c0_i32 : i32, i32
  }
}

</mosaic_0001>

<llo_original>
// kernel: dec_block_forward.1
$region0: #{dec_block_forward.1}
  #allocation0 [shape = 'u32[]', space=smem, size = 0x4, offset = 0x4, fixed_abs, tag = 'smem constant byte address 0x4 - core index']
  #allocation1 [shape = 'u32[144,128]{1,0:T(1,128)}', space=vmem, size = 0x12000, scoped, tag = 'internal scratch']
  %s0 = inlined_call_operand.vmem [shape: f32[2,1], index: 0, kind: input, shape index: {}]
  %s1 = inlined_call_operand.vmem [shape: f32[2,8,32], index: 1, kind: input, shape index: {}]
  %s2 = inlined_call_operand.vmem [shape: f32[2,8], index: 2, kind: input, shape index: {}]
  %s3 = inlined_call_operand.hbm [shape: f32[32,128], index: 3, kind: input, shape index: {}]
  %s4 = inlined_call_operand.vmem [shape: f32[1,128], index: 4, kind: input, shape index: {}]
  %s5 = inlined_call_operand.vmem [shape: f32[1,128], index: 5, kind: input, shape index: {}]
  %s6 = inlined_call_operand.vmem [shape: f32[1,128], index: 6, kind: input, shape index: {}]
  %s7 = inlined_call_operand.hbm [shape: f32[256,256], index: 7, kind: input, shape index: {}]
  %s8 = inlined_call_operand.hbm [shape: f32[2,32,64], index: 8, kind: input, shape index: {}]
  %s9 = inlined_call_operand.vmem [shape: f32[2,1,64], index: 9, kind: input, shape index: {}]
  %s10 = inlined_call_operand.vmem [shape: f32[2,1,64], index: 10, kind: input, shape index: {}]
  %s11 = inlined_call_operand.vmem [shape: f32[2,1,64], index: 11, kind: input, shape index: {}]
  %s12 = inlined_call_operand.vmem [shape: f32[128,128], index: 12, kind: input, shape index: {}]
  %s13 = inlined_call_operand.hbm [shape: f32[2,32,64], index: 13, kind: input, shape index: {}]
  %s14 = inlined_call_operand.vmem [shape: f32[2,1,64], index: 14, kind: input, shape index: {}]
  %s15 = inlined_call_operand.hbm [shape: f32[2,64,64], index: 15, kind: input, shape index: {}]
  %s16 = inlined_call_operand.vmem [shape: f32[2,1,64], index: 16, kind: input, shape index: {}]
  %s17 = inlined_call_operand.vmem [shape: f32[96,32], index: 17, kind: input, shape index: {}]
  %s18 = inlined_call_operand.hbm [shape: f32[1,32], index: 18, kind: input, shape index: {}]
  %s19 = inlined_call_operand.hbm [shape: f32[1,32], index: 19, kind: input, shape index: {}]
  %s20 = inlined_call_operand.vmem [shape: f32[1,32], index: 20, kind: input, shape index: {}]
  %s21 = inlined_call_operand.hbm [shape: f32[2,32], index: 21, kind: output, shape index: {}]
  %s22 = sld [smem:[#allocation0]]
  $region122: #{dec_block_forward.1} parent=0
    _
  %s24 = ssub.s32 1, %s22
  %s25 = scalar_select 0, %s24, %s22
  $region1: #{dec_block_forward.1} parent=0
    #allocation2 [shape = 'u8[16384]{0}', space=vmem, size = 0x4000, scoped, tag = 'input window, operand 3, single buffered']
    #allocation3 [shape = 's32[1]{0}', space=sflag, size = 0x4, scoped, tag = 'scoped memory for dec_block_forward.1']
    #allocation4 [shape = 's32[1]{0}', space=sflag, size = 0x4, scoped, tag = 'scoped memory for dec_block_forward.1']
    #allocation5 [shape = 'u8[262144]{0}', space=vmem, size = 0x40000, scoped, tag = 'input window, operand 7, single buffered']
    #allocation6 [shape = 's32[1]{0}', space=sflag, size = 0x4, scoped, tag = 'scoped memory for dec_block_forward.1']
    #allocation7 [shape = 'u8[32768]{0}', space=vmem, size = 0x8000, scoped, tag = 'input window, operand 8, single buffered']
    #allocation8 [shape = 'u8[32768]{0}', space=vmem, size = 0x8000, scoped, tag = 'input window, operand 13, single buffered']
    #allocation9 [shape = 's32[1]{0}', space=sflag, size = 0x4, scoped, tag = 'scoped memory for dec_block_forward.1']
    #allocation10 [shape = 'u8[65536]{0}', space=vmem, size = 0x10000, scoped, tag = 'input window, operand 15, single buffered']
    #allocation11 [shape = 'u8[512]{0}', space=vmem, size = 0x400, scoped, tag = 'input window, operand 18, single buffered']
    #allocation12 [shape = 's32[1]{0}', space=sflag, size = 0x4, scoped, tag = 'scoped memory for dec_block_forward.1']
    #allocation13 [shape = 'u8[512]{0}', space=vmem, size = 0x400, scoped, tag = 'input window, operand 19, single buffered']
    #allocation14 [shape = 'u8[1024]{0}', space=vmem, size = 0x400, scoped, tag = 'output window, operand 0, single buffered']
    %26 = vsyncpa [#allocation3], 0
    %27 = vsyncpa [#allocation6], 0
    %28 = vsyncpa [#allocation9], 0
    %29 = vsyncpa [#allocation12], 0
    %30 = vsyncpa [#allocation4], 0
    // Predicated region
    $region2: #{dec_block_forward.1} parent=1 // pred_check
      _
    $region3: #{dec_block_forward.1} parent=1 // pred_check_branch
      %32 = sbr.rel (0) target = $region5
    $region4: #{dec_block_forward.1} parent=1 // pred_region
      _
    $region5: #{dec_block_forward.1} parent=1 // pred_fallthru
      _
    // Predicated region
    $region6: #{dec_block_forward.1} parent=1 // pred_check
      _
    $region7: #{dec_block_forward.1} parent=1 // pred_check_branch
      %34 = sbr.rel (0) target = $region9
    $region8: #{dec_block_forward.1} parent=1 // pred_region
      _
    $region9: #{dec_block_forward.1} parent=1 // pred_fallthru
      _
    // Predicated region
    $region10: #{dec_block_forward.1} parent=1 // pred_check
      _
    $region11: #{dec_block_forward.1} parent=1 // pred_check_branch
      %36 = sbr.rel (0) target = $region13
    $region12: #{dec_block_forward.1} parent=1 // pred_region
      _
    $region13: #{dec_block_forward.1} parent=1 // pred_fallthru
      _
    // Predicated region
    $region14: #{dec_block_forward.1} parent=1 // pred_check
      _
    $region15: #{dec_block_forward.1} parent=1 // pred_check_branch
      %38 = sbr.rel (0) target = $region17
    $region16: #{dec_block_forward.1} parent=1 // pred_region
      %s40 = ssub.s32 512, 512
      %41 = vsyncadd [#allocation3], %s40
      %s42 = sshll.u32 [#allocation2], 4
      %s43 = int_to_ptr.vmem [resolvable:$true] %s42
      %48 = dma.hbm_to_vmem [thread:$0]  %s3, 512, %s43, [#allocation3], 128, 128, 8
    $region17: #{dec_block_forward.1} parent=1 // pred_fallthru
      _
    // Predicated region
    $region18: #{dec_block_forward.1} parent=1 // pred_check
      _
    $region19: #{dec_block_forward.1} parent=1 // pred_check_branch
      %50 = sbr.rel (0) target = $region21
    $region20: #{dec_block_forward.1} parent=1 // pred_region
      _
    $region21: #{dec_block_forward.1} parent=1 // pred_fallthru
      _
    // Predicated region
    $region22: #{dec_block_forward.1} parent=1 // pred_check
      _
    $region23: #{dec_block_forward.1} parent=1 // pred_check_branch
      %52 = sbr.rel (0) target = $region25
    $region24: #{dec_block_forward.1} parent=1 // pred_region
      _
    $region25: #{dec_block_forward.1} parent=1 // pred_fallthru
      _
    // Predicated region
    $region26: #{dec_block_forward.1} parent=1 // pred_check
      _
    $region27: #{dec_block_forward.1} parent=1 // pred_check_branch
      %54 = sbr.rel (0) target = $region29
    $region28: #{dec_block_forward.1} parent=1 // pred_region
      _
    $region29: #{dec_block_forward.1} parent=1 // pred_fallthru
      _
    // Predicated region
    $region30: #{dec_block_forward.1} parent=1 // pred_check
      _
    $region31: #{dec_block_forward.1} parent=1 // pred_check_branch
      %56 = sbr.rel (0) target = $region33
    $region32: #{dec_block_forward.1} parent=1 // pred_region
      %s58 = ssub.s32 8192, 8192
      %59 = vsyncadd [#allocation6], %s58
      %s60 = sshll.u32 [#allocation5], 4
      %s61 = int_to_ptr.vmem [resolvable:$true] %s60
      %66 = dma.hbm_to_vmem [thread:$0]  %s7, 8192, %s61, [#allocation6], 256, 256, 16
    $region33: #{dec_block_forward.1} parent=1 // pred_fallthru
      _
    // Predicated region
    $region34: #{dec_block_forward.1} parent=1 // pred_check
      _
    $region35: #{dec_block_forward.1} parent=1 // pred_check_branch
      %68 = sbr.rel (0) target = $region37
    $region36: #{dec_block_forward.1} parent=1 // pred_region
      %s70 = ssub.s32 1024, 1024
      %71 = vsyncadd [#allocation6], %s70
      %s72 = sshll.u32 [#allocation7], 4
      %s73 = int_to_ptr.vmem [resolvable:$true] %s72
      %78 = dma.hbm_to_vmem [thread:$0]  %s8, 1024, %s73, [#allocation6], 128, 128, 8
    $region37: #{dec_block_forward.1} parent=1 // pred_fallthru
      _
    // Predicated region
    $region38: #{dec_block_forward.1} parent=1 // pred_check
      _
    $region39: #{dec_block_forward.1} parent=1 // pred_check_branch
      %80 = sbr.rel (0) target = $region41
    $region40: #{dec_block_forward.1} parent=1 // pred_region
      _
    $region41: #{dec_block_forward.1} parent=1 // pred_fallthru
      _
    // Predicated region
    $region42: #{dec_block_forward.1} parent=1 // pred_check
      _
    $region43: #{dec_block_forward.1} parent=1 // pred_check_branch
      %82 = sbr.rel (0) target = $region45
    $region44: #{dec_block_forward.1} parent=1 // pred_region
      _
    $region45: #{dec_block_forward.1} parent=1 // pred_fallthru
      _
    // Predicated region
    $region46: #{dec_block_forward.1} parent=1 // pred_check
      _
    $region47: #{dec_block_forward.1} parent=1 // pred_check_branch
      %84 = sbr.rel (0) target = $region49
    $region48: #{dec_block_forward.1} parent=1 // pred_region
      _
    $region49: #{dec_block_forward.1} parent=1 // pred_fallthru
      _
    // Predicated region
    $region50: #{dec_block_forward.1} parent=1 // pred_check
      _
    $region51: #{dec_block_forward.1} parent=1 // pred_check_branch
      %86 = sbr.rel (0) target = $region53
    $region52: #{dec_block_forward.1} parent=1 // pred_region
      _
    $region53: #{dec_block_forward.1} parent=1 // pred_fallthru
      _
    // Predicated region
    $region54: #{dec_block_forward.1} parent=1 // pred_check
      _
    $region55: #{dec_block_forward.1} parent=1 // pred_check_branch
      %88 = sbr.rel (0) target = $region57
    $region56: #{dec_block_forward.1} parent=1 // pred_region
      %s90 = ssub.s32 1024, 1024
      %91 = vsyncadd [#allocation9], %s90
      %s92 = sshll.u32 [#allocation8], 4
      %s93 = int_to_ptr.vmem [resolvable:$true] %s92
      %98 = dma.hbm_to_vmem [thread:$0]  %s13, 1024, %s93, [#allocation9], 128, 128, 8
    $region57: #{dec_block_forward.1} parent=1 // pred_fallthru
      _
    // Predicated region
    $region58: #{dec_block_forward.1} parent=1 // pred_check
      _
    $region59: #{dec_block_forward.1} parent=1 // pred_check_branch
      %100 = sbr.rel (0) target = $region61
    $region60: #{dec_block_forward.1} parent=1 // pred_region
      _
    $region61: #{dec_block_forward.1} parent=1 // pred_fallthru
      _
    // Predicated region
    $region62: #{dec_block_forward.1} parent=1 // pred_check
      _
    $region63: #{dec_block_forward.1} parent=1 // pred_check_branch
      %102 = sbr.rel (0) target = $region65
    $region64: #{dec_block_forward.1} parent=1 // pred_region
      %s104 = ssub.s32 2048, 2048
      %105 = vsyncadd [#allocation9], %s104
      %s106 = sshll.u32 [#allocation10], 4
      %s107 = int_to_ptr.vmem [resolvable:$true] %s106
      %112 = dma.hbm_to_vmem [thread:$0]  %s15, 2048, %s107, [#allocation9], 128, 128, 8
    $region65: #{dec_block_forward.1} parent=1 // pred_fallthru
      _
    // Predicated region
    $region66: #{dec_block_forward.1} parent=1 // pred_check
      _
    $region67: #{dec_block_forward.1} parent=1 // pred_check_branch
      %114 = sbr.rel (0) target = $region69
    $region68: #{dec_block_forward.1} parent=1 // pred_region
      _
    $region69: #{dec_block_forward.1} parent=1 // pred_fallthru
      _
    // Predicated region
    $region70: #{dec_block_forward.1} parent=1 // pred_check
      _
    $region71: #{dec_block_forward.1} parent=1 // pred_check_branch
      %116 = sbr.rel (0) target = $region73
    $region72: #{dec_block_forward.1} parent=1 // pred_region
      _
    $region73: #{dec_block_forward.1} parent=1 // pred_fallthru
      _
    // Predicated region
    $region74: #{dec_block_forward.1} parent=1 // pred_check
      _
    $region75: #{dec_block_forward.1} parent=1 // pred_check_branch
      %118 = sbr.rel (0) target = $region77
    $region76: #{dec_block_forward.1} parent=1 // pred_region
      %s120 = ssub.s32 16, 16
      %121 = vsyncadd [#allocation12], %s120
      %s123 = sshll.u32 [#allocation11], 4
      %s124 = int_to_ptr.vmem [resolvable:$true] %s123
      %126 = dma.hbm_to_vmem [thread:$0]  %s18, 16, %s124, [#allocation12]
    $region77: #{dec_block_forward.1} parent=1 // pred_fallthru
      _
    // Predicated region
    $region78: #{dec_block_forward.1} parent=1 // pred_check
      _
    $region79: #{dec_block_forward.1} parent=1 // pred_check_branch
      %128 = sbr.rel (0) target = $region81
    $region80: #{dec_block_forward.1} parent=1 // pred_region
      %s130 = ssub.s32 16, 16
      %131 = vsyncadd [#allocation12], %s130
      %s133 = sshll.u32 [#allocation13], 4
      %s134 = int_to_ptr.vmem [resolvable:$true] %s133
      %136 = dma.hbm_to_vmem [thread:$0]  %s19, 16, %s134, [#allocation12]
    $region81: #{dec_block_forward.1} parent=1 // pred_fallthru
      _
    // Predicated region
    $region82: #{dec_block_forward.1} parent=1 // pred_check
      _
    $region83: #{dec_block_forward.1} parent=1 // pred_check_branch
      %138 = sbr.rel (0) target = $region85
    $region84: #{dec_block_forward.1} parent=1 // pred_region
      _
    $region85: #{dec_block_forward.1} parent=1 // pred_fallthru
      _
    // Predicated region
    $region86: #{dec_block_forward.1} parent=1 // pred_check
      _
    $region87: #{dec_block_forward.1} parent=1 // pred_check_branch
      %140 = sbr.rel (0) target = $region89
    $region88: #{dec_block_forward.1} parent=1 // pred_region
      %141 = dma.done [#allocation3], 512
    $region89: #{dec_block_forward.1} parent=1 // pred_fallthru
      _
    // Predicated region
    $region90: #{dec_block_forward.1} parent=1 // pred_check
      _
    $region91: #{dec_block_forward.1} parent=1 // pred_check_branch
      %143 = sbr.rel (0) target = $region93
    $region92: #{dec_block_forward.1} parent=1 // pred_region
      %144 = dma.done [#allocation6], 8192
    $region93: #{dec_block_forward.1} parent=1 // pred_fallthru
      _
    // Predicated region
    $region94: #{dec_block_forward.1} parent=1 // pred_check
      _
    $region95: #{dec_block_forward.1} parent=1 // pred_check_branch
      %146 = sbr.rel (0) target = $region97
    $region96: #{dec_block_forward.1} parent=1 // pred_region
      %147 = dma.done [#allocation6], 1024
    $region97: #{dec_block_forward.1} parent=1 // pred_fallthru
      _
    // Predicated region
    $region98: #{dec_block_forward.1} parent=1 // pred_check
      _
    $region99: #{dec_block_forward.1} parent=1 // pred_check_branch
      %149 = sbr.rel (0) target = $region101
    $region100: #{dec_block_forward.1} parent=1 // pred_region
      %150 = dma.done [#allocation9], 1024
    $region101: #{dec_block_forward.1} parent=1 // pred_fallthru
      _
    // Predicated region
    $region102: #{dec_block_forward.1} parent=1 // pred_check
      _
    $region103: #{dec_block_forward.1} parent=1 // pred_check_branch
      %152 = sbr.rel (0) target = $region105
    $region104: #{dec_block_forward.1} parent=1 // pred_region
      %153 = dma.done [#allocation9], 2048
    $region105: #{dec_block_forward.1} parent=1 // pred_fallthru
      _
    // Predicated region
    $region106: #{dec_block_forward.1} parent=1 // pred_check
      _
    $region107: #{dec_block_forward.1} parent=1 // pred_check_branch
      %155 = sbr.rel (0) target = $region109
    $region108: #{dec_block_forward.1} parent=1 // pred_region
      %156 = dma.done [#allocation12], 16
    $region109: #{dec_block_forward.1} parent=1 // pred_fallthru
      _
    // Predicated region
    $region110: #{dec_block_forward.1} parent=1 // pred_check
      _
    $region111: #{dec_block_forward.1} parent=1 // pred_check_branch
      %158 = sbr.rel (0) target = $region113
    $region112: #{dec_block_forward.1} parent=1 // pred_region
      %159 = dma.done [#allocation12], 16
    $region113: #{dec_block_forward.1} parent=1 // pred_fallthru
      _
    %v160 = vld [vmem:[%s1] sm:$0xff]
    %v161 = vld [vmem:[%s1 + $0x8] sm:$0xff]
    %v162 = vld [vmem:[%s2] sm:$0x3]
    %v163 = vlaneseq
    %v164 = vshrl.u32 %v163, 7
    %v165 = vsub.s32 0, %v164
    %v166 = vrot.slane %v162, %v165
    %168 = vbcast.lane.b32.xlu0 %v166, 256
    %v169 = vpop.permute.xlu0 %168
    %v170 = vlaneseq
    %v171 = vshrl.u32 %v170, 7
    %v172 = vsub.s32 1, %v171
    %v173 = vrot.slane %v162, %v172
    %175 = vbcast.lane.b32.xlu0 %v173, 256
    %v176 = vpop.permute.xlu0 %175
    %v177 = vrot.slane %v169, 4
    %v178 = vadd.f32 %v169, %v177
    %v179 = vrot.slane %v178, 2
    %v180 = vadd.f32 %v178, %v179
    %v181 = vrot.slane %v180, 1
    %v182 = vadd.f32 %v180, %v181
    %v183 = vrot.slane %v176, 4
    %v184 = vadd.f32 %v176, %v183
    %v185 = vrot.slane %v184, 2
    %v186 = vadd.f32 %v184, %v185
    %v187 = vrot.slane %v186, 1
    %v188 = vadd.f32 %v186, %v187
    %v189 = vmax.f32 %v182, 1e-06
    %v190 = vmax.f32 %v188, 1e-06
    %v191 = vrcp.pop %v189
    %v192 = vrcp.pop %v190
    %v193 = vmul.f32 %v160, %v169
    %v194 = vmul.f32 %v161, %v176
    %vm195 = vcmask 261120
    %v196 = vsel %vm195, %v193, 0.0
    %v197 = vrot.slane %v196, 4
    %v198 = vadd.f32 %v196, %v197
    %v199 = vrot.slane %v198, 2
    %v200 = vadd.f32 %v198, %v199
    %v201 = vrot.slane %v200, 1
    %v202 = vadd.f32 %v200, %v201
    %v203 = vsel %vm195, %v194, 0.0
    %v204 = vrot.slane %v203, 4
    %v205 = vadd.f32 %v203, %v204
    %v206 = vrot.slane %v205, 2
    %v207 = vadd.f32 %v205, %v206
    %v208 = vrot.slane %v207, 1
    %v209 = vadd.f32 %v207, %v208
    %v210 = vmul.f32 %v202, %v191
    %v211 = vmul.f32 %v209, %v192
    %v212 = vld [vmem:[#allocation2] sm:$0xff]
    %v213 = vld [vmem:[#allocation2 + $0x8] sm:$0xff]
    %v214 = vld [vmem:[#allocation2 + $0x10] sm:$0xff]
    %v215 = vld [vmem:[#allocation2 + $0x18] sm:$0xff]
    %v216 = vld [vmem:[%s4] sm:$0x1]
    %v218 = vlaneseq
    %v219 = vshrl.u32 %v218, 7
    %v220 = vsub.s32 0, %v219
    %v221 = vrot.slane %v216, %v220
    %v224 = vsel %vm195, %v160, 0
    %v227 = vsel %vm195, %v161, 0
    %229 = vmatprep.subr.mxu0 0.0
    %230 = vmatpush1.msra.mxu0 %v212
    %231 = vmatprep.subr.mxu0 0.0
    %232 = vmatpush1.msra.mxu0 %v213
    %233 = vmatprep.subr.mxu0 0.0
    %234 = vmatpush1.msra.mxu0 %v214
    %235 = vmatprep.subr.mxu0 0.0
    %236 = vmatpush1.msra.mxu0 %v215
    %237 = vmatprep.subr.mxu0 0.0
    %238 = vmatpush1.msra.mxu0 0.0
    %239 = vmatprep.subr.mxu0 0.0
    %240 = vmatpush1.msra.mxu0 0.0
    %241 = vmatprep.subr.mxu0 0.0
    %242 = vmatpush1.msra.mxu0 0.0
    %243 = vmatprep.subr.mxu0 0.0
    %244 = vmatpush1.msra.mxu0 0.0
    %245 = vmatprep.subr.mxu0 0.0
    %246 = vmatpush1.msra.mxu0 0.0
    %247 = vmatprep.subr.mxu0 0.0
    %248 = vmatpush1.msra.mxu0 0.0
    %249 = vmatprep.subr.mxu0 0.0
    %250 = vmatpush1.msra.mxu0 0.0
    %251 = vmatprep.subr.mxu0 0.0
    %252 = vmatpush1.msra.mxu0 0.0
    %253 = vmatprep.subr.mxu0 0.0
    %254 = vmatpush1.msra.mxu0 0.0
    %255 = vmatprep.subr.mxu0 0.0
    %256 = vmatpush1.msra.mxu0 0.0
    %257 = vmatprep.subr.mxu0 0.0
    %258 = vmatpush1.msra.mxu0 0.0
    %259 = vmatprep.subr.mxu0 0.0
    %260 = vmatpush1.msra.mxu0 0.0
    %261 = vmatprep.subr.mxu0 0.0
    %262 = vmatpush1.msra.mxu0 0.0
    %263 = vmatprep.subr.mxu0 0.0
    %264 = vmatpush1.msra.mxu0 0.0
    %265 = vmatprep.subr.mxu0 0.0
    %266 = vmatpush1.msra.mxu0 0.0
    %267 = vmatprep.subr.mxu0 0.0
    %268 = vmatpush1.msra.mxu0 0.0
    %269 = vmatprep.subr.mxu0 0.0
    %270 = vmatpush1.msra.mxu0 0.0
    %271 = vmatprep.subr.mxu0 0.0
    %272 = vmatpush1.msra.mxu0 0.0
    %273 = vmatprep.subr.mxu0 0.0
    %274 = vmatpush1.msra.mxu0 0.0
    %275 = vmatprep.subr.mxu0 0.0
    %276 = vmatpush1.msra.mxu0 0.0
    %277 = vmatprep.subr.mxu0 0.0
    %278 = vmatpush1.msra.mxu0 0.0
    %279 = vmatprep.subr.mxu0 0.0
    %280 = vmatpush1.msra.mxu0 0.0
    %281 = vmatprep.subr.mxu0 0.0
    %282 = vmatpush1.msra.mxu0 0.0
    %283 = vmatprep.subr.mxu0 0.0
    %284 = vmatpush1.msra.mxu0 0.0
    %285 = vmatprep.subr.mxu0 0.0
    %286 = vmatpush1.msra.mxu0 0.0
    %287 = vmatprep.subr.mxu0 0.0
    %288 = vmatpush1.msra.mxu0 0.0
    %289 = vmatprep.subr.mxu0 0.0
    %290 = vmatpush1.msra.mxu0 0.0
    %291 = vmatprep.subr.mxu0 0.0
    %292 = vmatpush1.msra.mxu0 0.0
    %293 = vmatprep.mubr.f32.mxu0 0.0
    %294 = vmatmul.mubr.f32.gmra.mrb[0].mxu0 %v224
    %v295 = vpop.f32.mrb[0].mxu0
    %v296 = vadd.f32 %v221, %v295
    %v297 = vpop.f32.mrb[0].mxu0
    %298 = vmatprep.mubr.f32.mxu0 0.0
    %299 = vmatmul.mubr.f32.gmra.mrb[0].mxu0 %v227
    %v300 = vpop.f32.mrb[0].mxu0
    %v301 = vadd.f32 %v221, %v300
    %v302 = vpop.f32.mrb[0].mxu0
    %303 = vdwg.mxu0
    %vm304 = vcmp.gt.f32.partialorder %v296, 0.0
    %vm305 = vcmp.gt.f32.partialorder %v301, 0.0
    %v306 = vrcp.pop 1.3
    %v307 = vmul.f32 %v296, %v306
    %v308 = vmul.f32 %v301, %v306
    %v309 = vmul.f32 %v307, 1.442695
    %v310 = vpow.pop %v309
    %v311 = vmul.f32 %v308, 1.442695
    %v312 = vpow.pop %v311
    %v313 = vsub.f32 %v310, 1.0
    %v314 = vsub.f32 %v312, 1.0
    %v315 = vmul.f32 %v313, 1.3
    %v316 = vmul.f32 %v314, 1.3
    %v317 = vsel %vm304, %v296, %v315
    %v318 = vsel %vm305, %v301, %v316
    %v319 = vld [vmem:[%s5] sm:$0x1]
    %v320 = vld [vmem:[%s6] sm:$0x1]
    %v321 = vld [vmem:[#allocation5] sm:$0xff]
    %v322 = vld [vmem:[#allocation5 + $0x8] sm:$0xff]
    %v323 = vld [vmem:[#allocation5 + $0x10] sm:$0xff]
    %v324 = vld [vmem:[#allocation5 + $0x18] sm:$0xff]
    %v325 = vld [vmem:[#allocation5 + $0x20] sm:$0xff]
    %v326 = vld [vmem:[#allocation5 + $0x28] sm:$0xff]
    %v327 = vld [vmem:[#allocation5 + $0x30] sm:$0xff]
    %v328 = vld [vmem:[#allocation5 + $0x38] sm:$0xff]
    %v329 = vld [vmem:[#allocation5 + $0x40] sm:$0xff]
    %v330 = vld [vmem:[#allocation5 + $0x48] sm:$0xff]
    %v331 = vld [vmem:[#allocation5 + $0x50] sm:$0xff]
    %v332 = vld [vmem:[#allocation5 + $0x58] sm:$0xff]
    %v333 = vld [vmem:[#allocation5 + $0x60] sm:$0xff]
    %v334 = vld [vmem:[#allocation5 + $0x68] sm:$0xff]
    %v335 = vld [vmem:[#allocation5 + $0x70] sm:$0xff]
    %v336 = vld [vmem:[#allocation5 + $0x78] sm:$0xff]
    %v337 = vld [vmem:[#allocation5 + $0x80] sm:$0xff]
    %v338 = vld [vmem:[#allocation5 + $0x88] sm:$0xff]
    %v339 = vld [vmem:[#allocation5 + $0x90] sm:$0xff]
    %v340 = vld [vmem:[#allocation5 + $0x98] sm:$0xff]
    %v341 = vld [vmem:[#allocation5 + $0xa0] sm:$0xff]
    %v342 = vld [vmem:[#allocation5 + $0xa8] sm:$0xff]
    %v343 = vld [vmem:[#allocation5 + $0xb0] sm:$0xff]
    %v344 = vld [vmem:[#allocation5 + $0xb8] sm:$0xff]
    %v345 = vld [vmem:[#allocation5 + $0xc0] sm:$0xff]
    %v346 = vld [vmem:[#allocation5 + $0xc8] sm:$0xff]
    %v347 = vld [vmem:[#allocation5 + $0xd0] sm:$0xff]
    %v348 = vld [vmem:[#allocation5 + $0xd8] sm:$0xff]
    %v349 = vld [vmem:[#allocation5 + $0xe0] sm:$0xff]
    %v350 = vld [vmem:[#allocation5 + $0xe8] sm:$0xff]
    %v351 = vld [vmem:[#allocation5 + $0xf0] sm:$0xff]
    %v352 = vld [vmem:[#allocation5 + $0xf8] sm:$0xff]
    %v353 = vld [vmem:[#allocation5 + $0x100] sm:$0xff]
    %v354 = vld [vmem:[#allocation5 + $0x108] sm:$0xff]
    %v355 = vld [vmem:[#allocation5 + $0x110] sm:$0xff]
    %v356 = vld [vmem:[#allocation5 + $0x118] sm:$0xff]
    %v357 = vld [vmem:[#allocation5 + $0x120] sm:$0xff]
    %v358 = vld [vmem:[#allocation5 + $0x128] sm:$0xff]
    %v359 = vld [vmem:[#allocation5 + $0x130] sm:$0xff]
    %v360 = vld [vmem:[#allocation5 + $0x138] sm:$0xff]
    %v361 = vld [vmem:[#allocation5 + $0x140] sm:$0xff]
    %v362 = vld [vmem:[#allocation5 + $0x148] sm:$0xff]
    %v363 = vld [vmem:[#allocation5 + $0x150] sm:$0xff]
    %v364 = vld [vmem:[#allocation5 + $0x158] sm:$0xff]
    %v365 = vld [vmem:[#allocation5 + $0x160] sm:$0xff]
    %v366 = vld [vmem:[#allocation5 + $0x168] sm:$0xff]
    %v367 = vld [vmem:[#allocation5 + $0x170] sm:$0xff]
    %v368 = vld [vmem:[#allocation5 + $0x178] sm:$0xff]
    %v369 = vld [vmem:[#allocation5 + $0x180] sm:$0xff]
    %v370 = vld [vmem:[#allocation5 + $0x188] sm:$0xff]
    %v371 = vld [vmem:[#allocation5 + $0x190] sm:$0xff]
    %v372 = vld [vmem:[#allocation5 + $0x198] sm:$0xff]
    %v373 = vld [vmem:[#allocation5 + $0x1a0] sm:$0xff]
    %v374 = vld [vmem:[#allocation5 + $0x1a8] sm:$0xff]
    %v375 = vld [vmem:[#allocation5 + $0x1b0] sm:$0xff]
    %v376 = vld [vmem:[#allocation5 + $0x1b8] sm:$0xff]
    %v377 = vld [vmem:[#allocation5 + $0x1c0] sm:$0xff]
    %v378 = vld [vmem:[#allocation5 + $0x1c8] sm:$0xff]
    %v379 = vld [vmem:[#allocation5 + $0x1d0] sm:$0xff]
    %v380 = vld [vmem:[#allocation5 + $0x1d8] sm:$0xff]
    %v381 = vld [vmem:[#allocation5 + $0x1e0] sm:$0xff]
    %v382 = vld [vmem:[#allocation5 + $0x1e8] sm:$0xff]
    %v383 = vld [vmem:[#allocation5 + $0x1f0] sm:$0xff]
    %v384 = vld [vmem:[#allocation5 + $0x1f8] sm:$0xff]
    %v385 = vmul.f32 %v317, %v317
    %v386 = vmul.f32 %v318, %v318
    %387 = vmatprep.subr.mxu0 %v322
    %388 = vmatpush1.msra.mxu0 %v321
    %389 = vmatprep.subr.mxu0 %v324
    %390 = vmatpush1.msra.mxu0 %v323
    %391 = vmatprep.subr.mxu0 %v326
    %392 = vmatpush1.msra.mxu0 %v325
    %393 = vmatprep.subr.mxu0 %v328
    %394 = vmatpush1.msra.mxu0 %v327
    %395 = vmatprep.subr.mxu0 %v330
    %396 = vmatpush1.msra.mxu0 %v329
    %397 = vmatprep.subr.mxu0 %v332
    %398 = vmatpush1.msra.mxu0 %v331
    %399 = vmatprep.subr.mxu0 %v334
    %400 = vmatpush1.msra.mxu0 %v333
    %401 = vmatprep.subr.mxu0 %v336
    %402 = vmatpush1.msra.mxu0 %v335
    %403 = vmatprep.subr.mxu0 %v338
    %404 = vmatpush1.msra.mxu0 %v337
    %405 = vmatprep.subr.mxu0 %v340
    %406 = vmatpush1.msra.mxu0 %v339
    %407 = vmatprep.subr.mxu0 %v342
    %408 = vmatpush1.msra.mxu0 %v341
    %409 = vmatprep.subr.mxu0 %v344
    %410 = vmatpush1.msra.mxu0 %v343
    %411 = vmatprep.subr.mxu0 %v346
    %412 = vmatpush1.msra.mxu0 %v345
    %413 = vmatprep.subr.mxu0 %v348
    %414 = vmatpush1.msra.mxu0 %v347
    %415 = vmatprep.subr.mxu0 %v350
    %416 = vmatpush1.msra.mxu0 %v349
    %417 = vmatprep.subr.mxu0 %v352
    %418 = vmatpush1.msra.mxu0 %v351
    %419 = vmatprep.subr.mxu0 %v354
    %420 = vmatpush1.msra.mxu0 %v353
    %421 = vmatprep.subr.mxu0 %v356
    %422 = vmatpush1.msra.mxu0 %v355
    %423 = vmatprep.subr.mxu0 %v358
    %424 = vmatpush1.msra.mxu0 %v357
    %425 = vmatprep.subr.mxu0 %v360
    %426 = vmatpush1.msra.mxu0 %v359
    %427 = vmatprep.subr.mxu0 %v362
    %428 = vmatpush1.msra.mxu0 %v361
    %429 = vmatprep.subr.mxu0 %v364
    %430 = vmatpush1.msra.mxu0 %v363
    %431 = vmatprep.subr.mxu0 %v366
    %432 = vmatpush1.msra.mxu0 %v365
    %433 = vmatprep.subr.mxu0 %v368
    %434 = vmatpush1.msra.mxu0 %v367
    %435 = vmatprep.subr.mxu0 %v370
    %436 = vmatpush1.msra.mxu0 %v369
    %437 = vmatprep.subr.mxu0 %v372
    %438 = vmatpush1.msra.mxu0 %v371
    %439 = vmatprep.subr.mxu0 %v374
    %440 = vmatpush1.msra.mxu0 %v373
    %441 = vmatprep.subr.mxu0 %v376
    %442 = vmatpush1.msra.mxu0 %v375
    %443 = vmatprep.subr.mxu0 %v378
    %444 = vmatpush1.msra.mxu0 %v377
    %445 = vmatprep.subr.mxu0 %v380
    %446 = vmatpush1.msra.mxu0 %v379
    %447 = vmatprep.subr.mxu0 %v382
    %448 = vmatpush1.msra.mxu0 %v381
    %449 = vmatprep.subr.mxu0 %v384
    %450 = vmatpush1.msra.mxu0 %v383
    %451 = vmatprep.mubr.f32.mxu0 %v385
    %452 = vmatmul.mubr.f32.gmra.mrb[0].mxu0 %v317
    %v453 = vpop.f32.mrb[0].mxu0
    %v454 = vadd.f32 0.0, %v453
    %v455 = vpop.f32.mrb[0].mxu0
    %v456 = vadd.f32 0.0, %v455
    %457 = vmatprep.mubr.f32.mxu0 %v386
    %458 = vmatmul.mubr.f32.gmra.mrb[0].mxu0 %v318
    %v459 = vpop.f32.mrb[0].mxu0
    %v460 = vadd.f32 0.0, %v459
    %v461 = vpop.f32.mrb[0].mxu0
    %v462 = vadd.f32 0.0, %v461
    %463 = vdwg.mxu0
    %v464 = vmul.f32 %v454, %v454
    %v465 = vmul.f32 %v460, %v460
    %v466 = vsub.f32 %v456, %v464
    %v467 = vsub.f32 %v462, %v465
    %v468 = vmax.f32 %v466, 0.0
    %v469 = vmax.f32 %v467, 0.0
    %v470 = vsub.f32 %v317, %v454
    %v471 = vsub.f32 %v318, %v460
    %v472 = vadd.f32 %v468, 1e-05
    %v473 = vadd.f32 %v469, 1e-05
    %v474 = vrsqrt.pop %v472
    %v475 = vrsqrt.pop %v473
    %v476 = vmul.f32 %v470, %v474
    %v477 = vmul.f32 %v471, %v475
    %v479 = vlaneseq
    %v480 = vshrl.u32 %v479, 7
    %v481 = vsub.s32 0, %v480
    %v482 = vrot.slane %v319, %v481
    %v484 = vmul.f32 %v476, %v482
    %v485 = vmul.f32 %v477, %v482
    %v487 = vlaneseq
    %v488 = vshrl.u32 %v487, 7
    %v489 = vsub.s32 0, %v488
    %v490 = vrot.slane %v320, %v489
    %v492 = vadd.f32 %v484, %v490
    %v493 = vadd.f32 %v485, %v490
    %v494 = vld [vmem:[#allocation7] sm:$0xff]
    %v495 = vld [vmem:[#allocation7 + $0x8] sm:$0xff]
    %v496 = vld [vmem:[#allocation7 + $0x10] sm:$0xff]
    %v497 = vld [vmem:[#allocation7 + $0x18] sm:$0xff]
    %v498 = vld [vmem:[%s9] sm:$0x1]
    %v500 = vlaneseq
    %v501 = vshrl.u32 %v500, 7
    %v502 = vsub.s32 0, %v501
    %v503 = vrot.slane %v498, %v502
    %vm507 = vcmask 1041409
    %v508 = vsel %vm507, %v211, %v210
    %v509 = vsel %vm195, %v508, 0
    %511 = vmatprep.subr.mxu0 0.0
    %512 = vmatpush1.msra.mxu0 %v494
    %513 = vmatprep.subr.mxu0 0.0
    %514 = vmatpush1.msra.mxu0 %v495
    %515 = vmatprep.subr.mxu0 0.0
    %516 = vmatpush1.msra.mxu0 %v496
    %517 = vmatprep.subr.mxu0 0.0
    %518 = vmatpush1.msra.mxu0 %v497
    %519 = vmatprep.subr.mxu0 0.0
    %520 = vmatpush1.msra.mxu0 0.0
    %521 = vmatprep.subr.mxu0 0.0
    %522 = vmatpush1.msra.mxu0 0.0
    %523 = vmatprep.subr.mxu0 0.0
    %524 = vmatpush1.msra.mxu0 0.0
    %525 = vmatprep.subr.mxu0 0.0
    %526 = vmatpush1.msra.mxu0 0.0
    %527 = vmatprep.subr.mxu0 0.0
    %528 = vmatpush1.msra.mxu0 0.0
    %529 = vmatprep.subr.mxu0 0.0
    %530 = vmatpush1.msra.mxu0 0.0
    %531 = vmatprep.subr.mxu0 0.0
    %532 = vmatpush1.msra.mxu0 0.0
    %533 = vmatprep.subr.mxu0 0.0
    %534 = vmatpush1.msra.mxu0 0.0
    %535 = vmatprep.subr.mxu0 0.0
    %536 = vmatpush1.msra.mxu0 0.0
    %537 = vmatprep.subr.mxu0 0.0
    %538 = vmatpush1.msra.mxu0 0.0
    %539 = vmatprep.subr.mxu0 0.0
    %540 = vmatpush1.msra.mxu0 0.0
    %541 = vmatprep.subr.mxu0 0.0
    %542 = vmatpush1.msra.mxu0 0.0
    %543 = vmatprep.subr.mxu0 0.0
    %544 = vmatpush1.msra.mxu0 0.0
    %545 = vmatprep.subr.mxu0 0.0
    %546 = vmatpush1.msra.mxu0 0.0
    %547 = vmatprep.subr.mxu0 0.0
    %548 = vmatpush1.msra.mxu0 0.0
    %549 = vmatprep.subr.mxu0 0.0
    %550 = vmatpush1.msra.mxu0 0.0
    %551 = vmatprep.subr.mxu0 0.0
    %552 = vmatpush1.msra.mxu0 0.0
    %553 = vmatprep.subr.mxu0 0.0
    %554 = vmatpush1.msra.mxu0 0.0
    %555 = vmatprep.subr.mxu0 0.0
    %556 = vmatpush1.msra.mxu0 0.0
    %557 = vmatprep.subr.mxu0 0.0
    %558 = vmatpush1.msra.mxu0 0.0
    %559 = vmatprep.subr.mxu0 0.0
    %560 = vmatpush1.msra.mxu0 0.0
    %561 = vmatprep.subr.mxu0 0.0
    %562 = vmatpush1.msra.mxu0 0.0
    %563 = vmatprep.subr.mxu0 0.0
    %564 = vmatpush1.msra.mxu0 0.0
    %565 = vmatprep.subr.mxu0 0.0
    %566 = vmatpush1.msra.mxu0 0.0
    %567 = vmatprep.subr.mxu0 0.0
    %568 = vmatpush1.msra.mxu0 0.0
    %569 = vmatprep.subr.mxu0 0.0
    %570 = vmatpush1.msra.mxu0 0.0
    %571 = vmatprep.subr.mxu0 0.0
    %572 = vmatpush1.msra.mxu0 0.0
    %573 = vmatprep.subr.mxu0 0.0
    %574 = vmatpush1.msra.mxu0 0.0
    %575 = vmatprep.mubr.f32.mxu0 0.0
    %576 = vmatmul.mubr.f32.gmra.mrb[0].mxu0 %v509
    %v577 = vpop.f32.mrb[0].mxu0
    %v578 = vadd.f32 %v503, %v577
    %v579 = vpop.f32.mrb[0].mxu0
    %580 = vdwg.mxu0
    %vm581 = vcmp.gt.f32.partialorder %v578, 0.0
    %v582 = vmul.f32 %v578, %v306
    %v583 = vmul.f32 %v582, 1.442695
    %v584 = vpow.pop %v583
    %v585 = vsub.f32 %v584, 1.0
    %v586 = vmul.f32 %v585, 1.3
    %v587 = vsel %vm581, %v578, %v586
    %v588 = vld [vmem:[%s10] sm:$0x1]
    %v589 = vld [vmem:[%s11] sm:$0x1]
    %v590 = vld [vmem:[%s12] sm:$0xff]
    %v591 = vld [vmem:[%s12 + $0x8] sm:$0xff]
    %v592 = vld [vmem:[%s12 + $0x10] sm:$0xff]
    %v593 = vld [vmem:[%s12 + $0x18] sm:$0xff]
    %v594 = vld [vmem:[%s12 + $0x20] sm:$0xff]
    %v595 = vld [vmem:[%s12 + $0x28] sm:$0xff]
    %v596 = vld [vmem:[%s12 + $0x30] sm:$0xff]
    %v597 = vld [vmem:[%s12 + $0x38] sm:$0xff]
    %v598 = vld [vmem:[%s12 + $0x40] sm:$0xff]
    %v599 = vld [vmem:[%s12 + $0x48] sm:$0xff]
    %v600 = vld [vmem:[%s12 + $0x50] sm:$0xff]
    %v601 = vld [vmem:[%s12 + $0x58] sm:$0xff]
    %v602 = vld [vmem:[%s12 + $0x60] sm:$0xff]
    %v603 = vld [vmem:[%s12 + $0x68] sm:$0xff]
    %v604 = vld [vmem:[%s12 + $0x70] sm:$0xff]
    %v605 = vld [vmem:[%s12 + $0x78] sm:$0xff]
    %v606 = vmul.f32 %v587, %v587
    %608 = vrot.lane.b32.xlu0 %v606, 64
    %v609 = vpop.permute.xlu0 %608
    %vm611 = vcmask 523264
    %v612 = vsel %vm611, %v587, %v609
    %613 = vmatprep.subr.mxu0 0.0
    %614 = vmatpush1.msra.mxu0 %v590
    %615 = vmatprep.subr.mxu0 0.0
    %616 = vmatpush1.msra.mxu0 %v591
    %617 = vmatprep.subr.mxu0 0.0
    %618 = vmatpush1.msra.mxu0 %v592
    %619 = vmatprep.subr.mxu0 0.0
    %620 = vmatpush1.msra.mxu0 %v593
    %621 = vmatprep.subr.mxu0 0.0
    %622 = vmatpush1.msra.mxu0 %v594
    %623 = vmatprep.subr.mxu0 0.0
    %624 = vmatpush1.msra.mxu0 %v595
    %625 = vmatprep.subr.mxu0 0.0
    %626 = vmatpush1.msra.mxu0 %v596
    %627 = vmatprep.subr.mxu0 0.0
    %628 = vmatpush1.msra.mxu0 %v597
    %629 = vmatprep.subr.mxu0 0.0
    %630 = vmatpush1.msra.mxu0 %v598
    %631 = vmatprep.subr.mxu0 0.0
    %632 = vmatpush1.msra.mxu0 %v599
    %633 = vmatprep.subr.mxu0 0.0
    %634 = vmatpush1.msra.mxu0 %v600
    %635 = vmatprep.subr.mxu0 0.0
    %636 = vmatpush1.msra.mxu0 %v601
    %637 = vmatprep.subr.mxu0 0.0
    %638 = vmatpush1.msra.mxu0 %v602
    %639 = vmatprep.subr.mxu0 0.0
    %640 = vmatpush1.msra.mxu0 %v603
    %641 = vmatprep.subr.mxu0 0.0
    %642 = vmatpush1.msra.mxu0 %v604
    %643 = vmatprep.subr.mxu0 0.0
    %644 = vmatpush1.msra.mxu0 %v605
    %645 = vmatprep.subr.mxu0 0.0
    %646 = vmatpush1.msra.mxu0 0.0
    %647 = vmatprep.subr.mxu0 0.0
    %648 = vmatpush1.msra.mxu0 0.0
    %649 = vmatprep.subr.mxu0 0.0
    %650 = vmatpush1.msra.mxu0 0.0
    %651 = vmatprep.subr.mxu0 0.0
    %652 = vmatpush1.msra.mxu0 0.0
    %653 = vmatprep.subr.mxu0 0.0
    %654 = vmatpush1.msra.mxu0 0.0
    %655 = vmatprep.subr.mxu0 0.0
    %656 = vmatpush1.msra.mxu0 0.0
    %657 = vmatprep.subr.mxu0 0.0
    %658 = vmatpush1.msra.mxu0 0.0
    %659 = vmatprep.subr.mxu0 0.0
    %660 = vmatpush1.msra.mxu0 0.0
    %661 = vmatprep.subr.mxu0 0.0
    %662 = vmatpush1.msra.mxu0 0.0
    %663 = vmatprep.subr.mxu0 0.0
    %664 = vmatpush1.msra.mxu0 0.0
    %665 = vmatprep.subr.mxu0 0.0
    %666 = vmatpush1.msra.mxu0 0.0
    %667 = vmatprep.subr.mxu0 0.0
    %668 = vmatpush1.msra.mxu0 0.0
    %669 = vmatprep.subr.mxu0 0.0
    %670 = vmatpush1.msra.mxu0 0.0
    %671 = vmatprep.subr.mxu0 0.0
    %672 = vmatpush1.msra.mxu0 0.0
    %673 = vmatprep.subr.mxu0 0.0
    %674 = vmatpush1.msra.mxu0 0.0
    %675 = vmatprep.subr.mxu0 0.0
    %676 = vmatpush1.msra.mxu0 0.0
    %677 = vmatprep.mubr.f32.mxu0 0.0
    %678 = vmatmul.mubr.f32.gmra.mrb[0].mxu0 %v612
    %v679 = vpop.f32.mrb[0].mxu0
    %v680 = vadd.f32 0.0, %v679
    %v681 = vpop.f32.mrb[0].mxu0
    %682 = vdwg.mxu0
    %v683 = vmul.f32 %v680, %v680
    %685 = vrot.lane.b32.xlu0 %v683, 64
    %v686 = vpop.permute.xlu0 %685
    %v688 = vsub.f32 %v680, %v686
    %v689 = vmax.f32 %v688, 0.0
    %v690 = vsub.f32 %v587, %v680
    %v691 = vadd.f32 %v689, 1e-05
    %v692 = vrsqrt.pop %v691
    %694 = vrot.lane.b32.xlu0 %v692, 64
    %v695 = vpop.permute.xlu0 %694
    %v697 = vmul.f32 %v690, %v695
    %v699 = vlaneseq
    %v700 = vshrl.u32 %v699, 7
    %v701 = vsub.s32 0, %v700
    %v702 = vrot.slane %v588, %v701
    %v704 = vmul.f32 %v697, %v702
    %v706 = vlaneseq
    %v707 = vshrl.u32 %v706, 7
    %v708 = vsub.s32 0, %v707
    %v709 = vrot.slane %v589, %v708
    %v711 = vadd.f32 %v704, %v709
    %v714 = vunpack.c.l.s4 1966171168
    %v715 = vunpack.c.0.s8 %v714
    %v716 = vlaneseq
    %v717 = vshrl.u32 %v716, 7
    %v718 = vsub.s32 %v715, %v717
    %v719 = vrot.slane %v711, %v718
    %v720 = vcombine.high %v719, %v719
    %v722 = vunpack.c.l.s4 1966171168
    %v723 = vunpack.c.0.s8 %v722
    %v724 = vlaneseq
    %v725 = vshrl.u32 %v724, 7
    %v726 = vsub.s32 %v723, %v725
    %v727 = vrot.slane %v719, %v726
    %v729 = vunpack.c.l.s4 1966171168
    %v730 = vunpack.c.0.s8 %v729
    %v731 = vlaneseq
    %v732 = vshrl.u32 %v731, 7
    %v733 = vsub.s32 %v730, %v732
    %v734 = vrot.slane %v720, %v733
    %v735 = vlaneseq
    %v736 = vshrl.u32 %v735, 7
    %v737 = vsub.s32 0, %v736
    %v738 = vrot.slane %v727, %v737
    %v739 = vlaneseq
    %v740 = vshrl.u32 %v739, 7
    %v741 = vsub.s32 0, %v740
    %v742 = vrot.slane %v734, %v741
    %v745 = vmul.f32 %v738, %v492
    %v746 = vmul.f32 %v742, %v493
    %v747 = vld [vmem:[#allocation8] sm:$0xff]
    %v748 = vld [vmem:[#allocation8 + $0x8] sm:$0xff]
    %v749 = vld [vmem:[#allocation8 + $0x10] sm:$0xff]
    %v750 = vld [vmem:[#allocation8 + $0x18] sm:$0xff]
    %v751 = vld [vmem:[%s14] sm:$0x1]
    %v753 = vlaneseq
    %v754 = vshrl.u32 %v753, 7
    %v755 = vsub.s32 0, %v754
    %v756 = vrot.slane %v751, %v755
    %v759 = vsel %vm195, %v745, 0
    %v762 = vsel %vm195, %v746, 0
    %764 = vmatprep.subr.mxu0 0.0
    %765 = vmatpush1.msra.mxu0 %v747
    %766 = vmatprep.subr.mxu0 0.0
    %767 = vmatpush1.msra.mxu0 %v748
    %768 = vmatprep.subr.mxu0 0.0
    %769 = vmatpush1.msra.mxu0 %v749
    %770 = vmatprep.subr.mxu0 0.0
    %771 = vmatpush1.msra.mxu0 %v750
    %772 = vmatprep.subr.mxu0 0.0
    %773 = vmatpush1.msra.mxu0 0.0
    %774 = vmatprep.subr.mxu0 0.0
    %775 = vmatpush1.msra.mxu0 0.0
    %776 = vmatprep.subr.mxu0 0.0
    %777 = vmatpush1.msra.mxu0 0.0
    %778 = vmatprep.subr.mxu0 0.0
    %779 = vmatpush1.msra.mxu0 0.0
    %780 = vmatprep.subr.mxu0 0.0
    %781 = vmatpush1.msra.mxu0 0.0
    %782 = vmatprep.subr.mxu0 0.0
    %783 = vmatpush1.msra.mxu0 0.0
    %784 = vmatprep.subr.mxu0 0.0
    %785 = vmatpush1.msra.mxu0 0.0
    %786 = vmatprep.subr.mxu0 0.0
    %787 = vmatpush1.msra.mxu0 0.0
    %788 = vmatprep.subr.mxu0 0.0
    %789 = vmatpush1.msra.mxu0 0.0
    %790 = vmatprep.subr.mxu0 0.0
    %791 = vmatpush1.msra.mxu0 0.0
    %792 = vmatprep.subr.mxu0 0.0
    %793 = vmatpush1.msra.mxu0 0.0
    %794 = vmatprep.subr.mxu0 0.0
    %795 = vmatpush1.msra.mxu0 0.0
    %796 = vmatprep.subr.mxu0 0.0
    %797 = vmatpush1.msra.mxu0 0.0
    %798 = vmatprep.subr.mxu0 0.0
    %799 = vmatpush1.msra.mxu0 0.0
    %800 = vmatprep.subr.mxu0 0.0
    %801 = vmatpush1.msra.mxu0 0.0
    %802 = vmatprep.subr.mxu0 0.0
    %803 = vmatpush1.msra.mxu0 0.0
    %804 = vmatprep.subr.mxu0 0.0
    %805 = vmatpush1.msra.mxu0 0.0
    %806 = vmatprep.subr.mxu0 0.0
    %807 = vmatpush1.msra.mxu0 0.0
    %808 = vmatprep.subr.mxu0 0.0
    %809 = vmatpush1.msra.mxu0 0.0
    %810 = vmatprep.subr.mxu0 0.0
    %811 = vmatpush1.msra.mxu0 0.0
    %812 = vmatprep.subr.mxu0 0.0
    %813 = vmatpush1.msra.mxu0 0.0
    %814 = vmatprep.subr.mxu0 0.0
    %815 = vmatpush1.msra.mxu0 0.0
    %816 = vmatprep.subr.mxu0 0.0
    %817 = vmatpush1.msra.mxu0 0.0
    %818 = vmatprep.subr.mxu0 0.0
    %819 = vmatpush1.msra.mxu0 0.0
    %820 = vmatprep.subr.mxu0 0.0
    %821 = vmatpush1.msra.mxu0 0.0
    %822 = vmatprep.subr.mxu0 0.0
    %823 = vmatpush1.msra.mxu0 0.0
    %824 = vmatprep.subr.mxu0 0.0
    %825 = vmatpush1.msra.mxu0 0.0
    %826 = vmatprep.subr.mxu0 0.0
    %827 = vmatpush1.msra.mxu0 0.0
    %828 = vmatprep.mubr.f32.mxu0 0.0
    %829 = vmatmul.mubr.f32.gmra.mrb[0].mxu0 %v759
    %v830 = vpop.f32.mrb[0].mxu0
    %v831 = vadd.f32 %v756, %v830
    %v832 = vpop.f32.mrb[0].mxu0
    %833 = vmatprep.mubr.f32.mxu0 0.0
    %834 = vmatmul.mubr.f32.gmra.mrb[0].mxu0 %v762
    %v835 = vpop.f32.mrb[0].mxu0
    %v836 = vadd.f32 %v756, %v835
    %v837 = vpop.f32.mrb[0].mxu0
    %838 = vdwg.mxu0
    %v839 = vmax.f32 %v831, 0.0
    %v840 = vmax.f32 %v836, 0.0
    %v841 = vld [vmem:[#allocation10] sm:$0xff]
    %v842 = vld [vmem:[#allocation10 + $0x8] sm:$0xff]
    %v843 = vld [vmem:[#allocation10 + $0x10] sm:$0xff]
    %v844 = vld [vmem:[#allocation10 + $0x18] sm:$0xff]
    %v845 = vld [vmem:[#allocation10 + $0x20] sm:$0xff]
    %v846 = vld [vmem:[#allocation10 + $0x28] sm:$0xff]
    %v847 = vld [vmem:[#allocation10 + $0x30] sm:$0xff]
    %v848 = vld [vmem:[#allocation10 + $0x38] sm:$0xff]
    %v849 = vld [vmem:[%s16] sm:$0x1]
    %v851 = vlaneseq
    %v852 = vshrl.u32 %v851, 7
    %v853 = vsub.s32 0, %v852
    %v854 = vrot.slane %v849, %v853
    %v857 = vsel %vm611, %v839, 0
    %v860 = vsel %vm611, %v840, 0
    %862 = vmatprep.subr.mxu0 0.0
    %863 = vmatpush1.msra.mxu0 %v841
    %864 = vmatprep.subr.mxu0 0.0
    %865 = vmatpush1.msra.mxu0 %v842
    %866 = vmatprep.subr.mxu0 0.0
    %867 = vmatpush1.msra.mxu0 %v843
    %868 = vmatprep.subr.mxu0 0.0
    %869 = vmatpush1.msra.mxu0 %v844
    %870 = vmatprep.subr.mxu0 0.0
    %871 = vmatpush1.msra.mxu0 %v845
    %872 = vmatprep.subr.mxu0 0.0
    %873 = vmatpush1.msra.mxu0 %v846
    %874 = vmatprep.subr.mxu0 0.0
    %875 = vmatpush1.msra.mxu0 %v847
    %876 = vmatprep.subr.mxu0 0.0
    %877 = vmatpush1.msra.mxu0 %v848
    %878 = vmatprep.subr.mxu0 0.0
    %879 = vmatpush1.msra.mxu0 0.0
    %880 = vmatprep.subr.mxu0 0.0
    %881 = vmatpush1.msra.mxu0 0.0
    %882 = vmatprep.subr.mxu0 0.0
    %883 = vmatpush1.msra.mxu0 0.0
    %884 = vmatprep.subr.mxu0 0.0
    %885 = vmatpush1.msra.mxu0 0.0
    %886 = vmatprep.subr.mxu0 0.0
    %887 = vmatpush1.msra.mxu0 0.0
    %888 = vmatprep.subr.mxu0 0.0
    %889 = vmatpush1.msra.mxu0 0.0
    %890 = vmatprep.subr.mxu0 0.0
    %891 = vmatpush1.msra.mxu0 0.0
    %892 = vmatprep.subr.mxu0 0.0
    %893 = vmatpush1.msra.mxu0 0.0
    %894 = vmatprep.subr.mxu0 0.0
    %895 = vmatpush1.msra.mxu0 0.0
    %896 = vmatprep.subr.mxu0 0.0
    %897 = vmatpush1.msra.mxu0 0.0
    %898 = vmatprep.subr.mxu0 0.0
    %899 = vmatpush1.msra.mxu0 0.0
    %900 = vmatprep.subr.mxu0 0.0
    %901 = vmatpush1.msra.mxu0 0.0
    %902 = vmatprep.subr.mxu0 0.0
    %903 = vmatpush1.msra.mxu0 0.0
    %904 = vmatprep.subr.mxu0 0.0
    %905 = vmatpush1.msra.mxu0 0.0
    %906 = vmatprep.subr.mxu0 0.0
    %907 = vmatpush1.msra.mxu0 0.0
    %908 = vmatprep.subr.mxu0 0.0
    %909 = vmatpush1.msra.mxu0 0.0
    %910 = vmatprep.subr.mxu0 0.0
    %911 = vmatpush1.msra.mxu0 0.0
    %912 = vmatprep.subr.mxu0 0.0
    %913 = vmatpush1.msra.mxu0 0.0
    %914 = vmatprep.subr.mxu0 0.0
    %915 = vmatpush1.msra.mxu0 0.0
    %916 = vmatprep.subr.mxu0 0.0
    %917 = vmatpush1.msra.mxu0 0.0
    %918 = vmatprep.subr.mxu0 0.0
    %919 = vmatpush1.msra.mxu0 0.0
    %920 = vmatprep.subr.mxu0 0.0
    %921 = vmatpush1.msra.mxu0 0.0
    %922 = vmatprep.subr.mxu0 0.0
    %923 = vmatpush1.msra.mxu0 0.0
    %924 = vmatprep.subr.mxu0 0.0
    %925 = vmatpush1.msra.mxu0 0.0
    %926 = vmatprep.mubr.f32.mxu0 0.0
    %927 = vmatmul.mubr.f32.gmra.mrb[0].mxu0 %v857
    %v928 = vpop.f32.mrb[0].mxu0
    %v929 = vadd.f32 %v854, %v928
    %v930 = vpop.f32.mrb[0].mxu0
    %931 = vmatprep.mubr.f32.mxu0 0.0
    %932 = vmatmul.mubr.f32.gmra.mrb[0].mxu0 %v860
    %v933 = vpop.f32.mrb[0].mxu0
    %v934 = vadd.f32 %v854, %v933
    %v935 = vpop.f32.mrb[0].mxu0
    %936 = vdwg.mxu0
    %v937 = vmul.f32 %v839, %v169
    %v938 = vmul.f32 %v840, %v176
    %v939 = vsel %vm611, %v937, 0.0
    %v940 = vrot.slane %v939, 4
    %v941 = vadd.f32 %v939, %v940
    %v942 = vrot.slane %v941, 2
    %v943 = vadd.f32 %v941, %v942
    %v944 = vrot.slane %v943, 1
    %v945 = vadd.f32 %v943, %v944
    %v946 = vsel %vm611, %v938, 0.0
    %v947 = vrot.slane %v946, 4
    %v948 = vadd.f32 %v946, %v947
    %v949 = vrot.slane %v948, 2
    %v950 = vadd.f32 %v948, %v949
    %v951 = vrot.slane %v950, 1
    %v952 = vadd.f32 %v950, %v951
    %v953 = vmul.f32 %v945, %v191
    %v954 = vmul.f32 %v952, %v192
    %v957 = vsel %vm507, %v954, %v953
    %v958 = vsel %vm611, %v957, 0
    %960 = vmatprep.subr.mxu0 0.0
    %961 = vmatpush1.msra.mxu0 %v841
    %962 = vmatprep.subr.mxu0 0.0
    %963 = vmatpush1.msra.mxu0 %v842
    %964 = vmatprep.subr.mxu0 0.0
    %965 = vmatpush1.msra.mxu0 %v843
    %966 = vmatprep.subr.mxu0 0.0
    %967 = vmatpush1.msra.mxu0 %v844
    %968 = vmatprep.subr.mxu0 0.0
    %969 = vmatpush1.msra.mxu0 %v845
    %970 = vmatprep.subr.mxu0 0.0
    %971 = vmatpush1.msra.mxu0 %v846
    %972 = vmatprep.subr.mxu0 0.0
    %973 = vmatpush1.msra.mxu0 %v847
    %974 = vmatprep.subr.mxu0 0.0
    %975 = vmatpush1.msra.mxu0 %v848
    %976 = vmatprep.subr.mxu0 0.0
    %977 = vmatpush1.msra.mxu0 0.0
    %978 = vmatprep.subr.mxu0 0.0
    %979 = vmatpush1.msra.mxu0 0.0
    %980 = vmatprep.subr.mxu0 0.0
    %981 = vmatpush1.msra.mxu0 0.0
    %982 = vmatprep.subr.mxu0 0.0
    %983 = vmatpush1.msra.mxu0 0.0
    %984 = vmatprep.subr.mxu0 0.0
    %985 = vmatpush1.msra.mxu0 0.0
    %986 = vmatprep.subr.mxu0 0.0
    %987 = vmatpush1.msra.mxu0 0.0
    %988 = vmatprep.subr.mxu0 0.0
    %989 = vmatpush1.msra.mxu0 0.0
    %990 = vmatprep.subr.mxu0 0.0
    %991 = vmatpush1.msra.mxu0 0.0
    %992 = vmatprep.subr.mxu0 0.0
    %993 = vmatpush1.msra.mxu0 0.0
    %994 = vmatprep.subr.mxu0 0.0
    %995 = vmatpush1.msra.mxu0 0.0
    %996 = vmatprep.subr.mxu0 0.0
    %997 = vmatpush1.msra.mxu0 0.0
    %998 = vmatprep.subr.mxu0 0.0
    %999 = vmatpush1.msra.mxu0 0.0
    %1000 = vmatprep.subr.mxu0 0.0
    %1001 = vmatpush1.msra.mxu0 0.0
    %1002 = vmatprep.subr.mxu0 0.0
    %1003 = vmatpush1.msra.mxu0 0.0
    %1004 = vmatprep.subr.mxu0 0.0
    %1005 = vmatpush1.msra.mxu0 0.0
    %1006 = vmatprep.subr.mxu0 0.0
    %1007 = vmatpush1.msra.mxu0 0.0
    %1008 = vmatprep.subr.mxu0 0.0
    %1009 = vmatpush1.msra.mxu0 0.0
    %1010 = vmatprep.subr.mxu0 0.0
    %1011 = vmatpush1.msra.mxu0 0.0
    %1012 = vmatprep.subr.mxu0 0.0
    %1013 = vmatpush1.msra.mxu0 0.0
    %1014 = vmatprep.subr.mxu0 0.0
    %1015 = vmatpush1.msra.mxu0 0.0
    %1016 = vmatprep.subr.mxu0 0.0
    %1017 = vmatpush1.msra.mxu0 0.0
    %1018 = vmatprep.subr.mxu0 0.0
    %1019 = vmatpush1.msra.mxu0 0.0
    %1020 = vmatprep.subr.mxu0 0.0
    %1021 = vmatpush1.msra.mxu0 0.0
    %1022 = vmatprep.subr.mxu0 0.0
    %1023 = vmatpush1.msra.mxu0 0.0
    %1024 = vmatprep.mubr.f32.mxu0 0.0
    %1025 = vmatmul.mubr.f32.gmra.mrb[0].mxu0 %v958
    %v1026 = vpop.f32.mrb[0].mxu0
    %v1027 = vadd.f32 %v854, %v1026
    %v1028 = vpop.f32.mrb[0].mxu0
    %1029 = vdwg.mxu0
    %v1030 = vxor.u32 %v1027, 2147483648
    %v1031 = vmul.f32 %v1030, 1.442695
    %v1032 = vpow.pop %v1031
    %v1033 = vadd.f32 %v1032, 1.0
    %v1034 = vrcp.pop %v1033
    %v1035 = vmul.f32 1.0, %v1034
    %vm1036 = vcmp.eq.f32.partialorder %v169, 0.0
    %vm1037 = vcmp.eq.f32.partialorder %v176, 0.0
    %v1038 = vsel %vm1036, 1, 0
    %v1039 = vsel %vm1037, 1, 0
    %vm1040 = vcmp.eq.s32.totalorder %v1038, 1
    %vm1041 = vcmp.eq.s32.totalorder %v1039, 1
    %v1042 = vsel %vm1040, -1e+09, %v929
    %v1043 = vsel %vm1041, -1e+09, %v934
    %v1044 = vsel %vm195, %v1042, -inf
    %v1045 = vrot.slane %v1044, 4
    %v1046 = vmax.f32 %v1044, %v1045
    %v1047 = vrot.slane %v1046, 2
    %v1048 = vmax.f32 %v1046, %v1047
    %v1049 = vrot.slane %v1048, 1
    %v1050 = vmax.f32 %v1048, %v1049
    %v1051 = vsel %vm195, %v1043, -inf
    %v1052 = vrot.slane %v1051, 4
    %v1053 = vmax.f32 %v1051, %v1052
    %v1054 = vrot.slane %v1053, 2
    %v1055 = vmax.f32 %v1053, %v1054
    %v1056 = vrot.slane %v1055, 1
    %v1057 = vmax.f32 %v1055, %v1056
    %v1058 = vsub.f32 %v1042, %v1050
    %v1059 = vsub.f32 %v1043, %v1057
    %v1060 = vmul.f32 %v1058, 1.442695
    %v1061 = vpow.pop %v1060
    %v1062 = vmul.f32 %v1059, 1.442695
    %v1063 = vpow.pop %v1062
    %v1064 = vsel %vm195, %v1061, 0.0
    %v1065 = vrot.slane %v1064, 4
    %v1066 = vadd.f32 %v1064, %v1065
    %v1067 = vrot.slane %v1066, 2
    %v1068 = vadd.f32 %v1066, %v1067
    %v1069 = vrot.slane %v1068, 1
    %v1070 = vadd.f32 %v1068, %v1069
    %v1071 = vsel %vm195, %v1063, 0.0
    %v1072 = vrot.slane %v1071, 4
    %v1073 = vadd.f32 %v1071, %v1072
    %v1074 = vrot.slane %v1073, 2
    %v1075 = vadd.f32 %v1073, %v1074
    %v1076 = vrot.slane %v1075, 1
    %v1077 = vadd.f32 %v1075, %v1076
    %v1078 = vrcp.pop %v1070
    %v1079 = vmul.f32 %v1061, %v1078
    %v1080 = vrcp.pop %v1077
    %v1081 = vmul.f32 %v1063, %v1080
    %1084 = vrot.lane.b32.xlu0 %v492, 96
    %v1085 = vpop.permute.xlu0 %1084
    %1086 = vrot.lane.b32.xlu0 %v493, 96
    %v1087 = vpop.permute.xlu0 %1086
    %v1090 = vmul.f32 %v1079, %v1085
    %v1091 = vmul.f32 %v1081, %v1087
    %v1092 = vsel %vm195, %v1090, 0.0
    %v1093 = vrot.slane %v1092, 4
    %v1094 = vadd.f32 %v1092, %v1093
    %v1095 = vrot.slane %v1094, 2
    %v1096 = vadd.f32 %v1094, %v1095
    %v1097 = vrot.slane %v1096, 1
    %v1098 = vadd.f32 %v1096, %v1097
    %v1099 = vsel %vm195, %v1091, 0.0
    %v1100 = vrot.slane %v1099, 4
    %v1101 = vadd.f32 %v1099, %v1100
    %v1102 = vrot.slane %v1101, 2
    %v1103 = vadd.f32 %v1101, %v1102
    %v1104 = vrot.slane %v1103, 1
    %v1105 = vadd.f32 %v1103, %v1104
    %v1108 = vsel %vm507, %v1105, %v1098
    %1109 = vrot.lane.b32.xlu0 %v1108, 32
    %v1110 = vpop.permute.xlu0 %1109
    %v1112 = vmul.f32 %v711, %v1110
    %v1113 = vmul.f32 %v1112, %v1035
    %s1114 = scalar_lea.vmem [#allocation7], 32
    %v1115 = vld [vmem:[%s1114] sm:$0xff]
    %v1116 = vld [vmem:[%s1114 + $0x8] sm:$0xff]
    %v1117 = vld [vmem:[%s1114 + $0x10] sm:$0xff]
    %v1118 = vld [vmem:[%s1114 + $0x18] sm:$0xff]
    %s1119 = scalar_lea.vmem %s9, 1
    %v1120 = vld [vmem:[%s1119] sm:$0x1]
    %v1122 = vlaneseq
    %v1123 = vshrl.u32 %v1122, 7
    %v1124 = vsub.s32 0, %v1123
    %v1125 = vrot.slane %v1120, %v1124
    %1128 = vrot.lane.b32.xlu0 %v1113, 96
    %v1129 = vpop.permute.xlu0 %1128
    %v1130 = vsel %vm195, %v1129, 0
    %1132 = vmatprep.subr.mxu0 0.0
    %1133 = vmatpush1.msra.mxu0 %v1115
    %1134 = vmatprep.subr.mxu0 0.0
    %1135 = vmatpush1.msra.mxu0 %v1116
    %1136 = vmatprep.subr.mxu0 0.0
    %1137 = vmatpush1.msra.mxu0 %v1117
    %1138 = vmatprep.subr.mxu0 0.0
    %1139 = vmatpush1.msra.mxu0 %v1118
    %1140 = vmatprep.subr.mxu0 0.0
    %1141 = vmatpush1.msra.mxu0 0.0
    %1142 = vmatprep.subr.mxu0 0.0
    %1143 = vmatpush1.msra.mxu0 0.0
    %1144 = vmatprep.subr.mxu0 0.0
    %1145 = vmatpush1.msra.mxu0 0.0
    %1146 = vmatprep.subr.mxu0 0.0
    %1147 = vmatpush1.msra.mxu0 0.0
    %1148 = vmatprep.subr.mxu0 0.0
    %1149 = vmatpush1.msra.mxu0 0.0
    %1150 = vmatprep.subr.mxu0 0.0
    %1151 = vmatpush1.msra.mxu0 0.0
    %1152 = vmatprep.subr.mxu0 0.0
    %1153 = vmatpush1.msra.mxu0 0.0
    %1154 = vmatprep.subr.mxu0 0.0
    %1155 = vmatpush1.msra.mxu0 0.0
    %1156 = vmatprep.subr.mxu0 0.0
    %1157 = vmatpush1.msra.mxu0 0.0
    %1158 = vmatprep.subr.mxu0 0.0
    %1159 = vmatpush1.msra.mxu0 0.0
    %1160 = vmatprep.subr.mxu0 0.0
    %1161 = vmatpush1.msra.mxu0 0.0
    %1162 = vmatprep.subr.mxu0 0.0
    %1163 = vmatpush1.msra.mxu0 0.0
    %1164 = vmatprep.subr.mxu0 0.0
    %1165 = vmatpush1.msra.mxu0 0.0
    %1166 = vmatprep.subr.mxu0 0.0
    %1167 = vmatpush1.msra.mxu0 0.0
    %1168 = vmatprep.subr.mxu0 0.0
    %1169 = vmatpush1.msra.mxu0 0.0
    %1170 = vmatprep.subr.mxu0 0.0
    %1171 = vmatpush1.msra.mxu0 0.0
    %1172 = vmatprep.subr.mxu0 0.0
    %1173 = vmatpush1.msra.mxu0 0.0
    %1174 = vmatprep.subr.mxu0 0.0
    %1175 = vmatpush1.msra.mxu0 0.0
    %1176 = vmatprep.subr.mxu0 0.0
    %1177 = vmatpush1.msra.mxu0 0.0
    %1178 = vmatprep.subr.mxu0 0.0
    %1179 = vmatpush1.msra.mxu0 0.0
    %1180 = vmatprep.subr.mxu0 0.0
    %1181 = vmatpush1.msra.mxu0 0.0
    %1182 = vmatprep.subr.mxu0 0.0
    %1183 = vmatpush1.msra.mxu0 0.0
    %1184 = vmatprep.subr.mxu0 0.0
    %1185 = vmatpush1.msra.mxu0 0.0
    %1186 = vmatprep.subr.mxu0 0.0
    %1187 = vmatpush1.msra.mxu0 0.0
    %1188 = vmatprep.subr.mxu0 0.0
    %1189 = vmatpush1.msra.mxu0 0.0
    %1190 = vmatprep.subr.mxu0 0.0
    %1191 = vmatpush1.msra.mxu0 0.0
    %1192 = vmatprep.subr.mxu0 0.0
    %1193 = vmatpush1.msra.mxu0 0.0
    %1194 = vmatprep.subr.mxu0 0.0
    %1195 = vmatpush1.msra.mxu0 0.0
    %1196 = vmatprep.mubr.f32.mxu0 0.0
    %1197 = vmatmul.mubr.f32.gmra.mrb[0].mxu0 %v1130
    %v1198 = vpop.f32.mrb[0].mxu0
    %v1199 = vadd.f32 %v1125, %v1198
    %v1200 = vpop.f32.mrb[0].mxu0
    %1201 = vdwg.mxu0
    %vm1202 = vcmp.gt.f32.partialorder %v1199, 0.0
    %v1203 = vmul.f32 %v1199, %v306
    %v1204 = vmul.f32 %v1203, 1.442695
    %v1205 = vpow.pop %v1204
    %v1206 = vsub.f32 %v1205, 1.0
    %v1207 = vmul.f32 %v1206, 1.3
    %v1208 = vsel %vm1202, %v1199, %v1207
    %s1209 = scalar_lea.vmem %s10, 1
    %v1210 = vld [vmem:[%s1209] sm:$0x1]
    %s1211 = scalar_lea.vmem %s11, 1
    %v1212 = vld [vmem:[%s1211] sm:$0x1]
    %v1213 = vmul.f32 %v1208, %v1208
    %1215 = vrot.lane.b32.xlu0 %v1213, 64
    %v1216 = vpop.permute.xlu0 %1215
    %v1218 = vsel %vm611, %v1208, %v1216
    %1219 = vmatprep.subr.mxu0 0.0
    %1220 = vmatpush1.msra.mxu0 %v590
    %1221 = vmatprep.subr.mxu0 0.0
    %1222 = vmatpush1.msra.mxu0 %v591
    %1223 = vmatprep.subr.mxu0 0.0
    %1224 = vmatpush1.msra.mxu0 %v592
    %1225 = vmatprep.subr.mxu0 0.0
    %1226 = vmatpush1.msra.mxu0 %v593
    %1227 = vmatprep.subr.mxu0 0.0
    %1228 = vmatpush1.msra.mxu0 %v594
    %1229 = vmatprep.subr.mxu0 0.0
    %1230 = vmatpush1.msra.mxu0 %v595
    %1231 = vmatprep.subr.mxu0 0.0
    %1232 = vmatpush1.msra.mxu0 %v596
    %1233 = vmatprep.subr.mxu0 0.0
    %1234 = vmatpush1.msra.mxu0 %v597
    %1235 = vmatprep.subr.mxu0 0.0
    %1236 = vmatpush1.msra.mxu0 %v598
    %1237 = vmatprep.subr.mxu0 0.0
    %1238 = vmatpush1.msra.mxu0 %v599
    %1239 = vmatprep.subr.mxu0 0.0
    %1240 = vmatpush1.msra.mxu0 %v600
    %1241 = vmatprep.subr.mxu0 0.0
    %1242 = vmatpush1.msra.mxu0 %v601
    %1243 = vmatprep.subr.mxu0 0.0
    %1244 = vmatpush1.msra.mxu0 %v602
    %1245 = vmatprep.subr.mxu0 0.0
    %1246 = vmatpush1.msra.mxu0 %v603
    %1247 = vmatprep.subr.mxu0 0.0
    %1248 = vmatpush1.msra.mxu0 %v604
    %1249 = vmatprep.subr.mxu0 0.0
    %1250 = vmatpush1.msra.mxu0 %v605
    %1251 = vmatprep.subr.mxu0 0.0
    %1252 = vmatpush1.msra.mxu0 0.0
    %1253 = vmatprep.subr.mxu0 0.0
    %1254 = vmatpush1.msra.mxu0 0.0
    %1255 = vmatprep.subr.mxu0 0.0
    %1256 = vmatpush1.msra.mxu0 0.0
    %1257 = vmatprep.subr.mxu0 0.0
    %1258 = vmatpush1.msra.mxu0 0.0
    %1259 = vmatprep.subr.mxu0 0.0
    %1260 = vmatpush1.msra.mxu0 0.0
    %1261 = vmatprep.subr.mxu0 0.0
    %1262 = vmatpush1.msra.mxu0 0.0
    %1263 = vmatprep.subr.mxu0 0.0
    %1264 = vmatpush1.msra.mxu0 0.0
    %1265 = vmatprep.subr.mxu0 0.0
    %1266 = vmatpush1.msra.mxu0 0.0
    %1267 = vmatprep.subr.mxu0 0.0
    %1268 = vmatpush1.msra.mxu0 0.0
    %1269 = vmatprep.subr.mxu0 0.0
    %1270 = vmatpush1.msra.mxu0 0.0
    %1271 = vmatprep.subr.mxu0 0.0
    %1272 = vmatpush1.msra.mxu0 0.0
    %1273 = vmatprep.subr.mxu0 0.0
    %1274 = vmatpush1.msra.mxu0 0.0
    %1275 = vmatprep.subr.mxu0 0.0
    %1276 = vmatpush1.msra.mxu0 0.0
    %1277 = vmatprep.subr.mxu0 0.0
    %1278 = vmatpush1.msra.mxu0 0.0
    %1279 = vmatprep.subr.mxu0 0.0
    %1280 = vmatpush1.msra.mxu0 0.0
    %1281 = vmatprep.subr.mxu0 0.0
    %1282 = vmatpush1.msra.mxu0 0.0
    %1283 = vmatprep.mubr.f32.mxu0 0.0
    %1284 = vmatmul.mubr.f32.gmra.mrb[0].mxu0 %v1218
    %v1285 = vpop.f32.mrb[0].mxu0
    %v1286 = vadd.f32 0.0, %v1285
    %v1287 = vpop.f32.mrb[0].mxu0
    %1288 = vdwg.mxu0
    %v1289 = vmul.f32 %v1286, %v1286
    %1291 = vrot.lane.b32.xlu0 %v1289, 64
    %v1292 = vpop.permute.xlu0 %1291
    %v1294 = vsub.f32 %v1286, %v1292
    %v1295 = vmax.f32 %v1294, 0.0
    %v1296 = vsub.f32 %v1208, %v1286
    %v1297 = vadd.f32 %v1295, 1e-05
    %v1298 = vrsqrt.pop %v1297
    %1300 = vrot.lane.b32.xlu0 %v1298, 64
    %v1301 = vpop.permute.xlu0 %1300
    %v1303 = vmul.f32 %v1296, %v1301
    %v1305 = vlaneseq
    %v1306 = vshrl.u32 %v1305, 7
    %v1307 = vsub.s32 0, %v1306
    %v1308 = vrot.slane %v1210, %v1307
    %v1310 = vmul.f32 %v1303, %v1308
    %v1312 = vlaneseq
    %v1313 = vshrl.u32 %v1312, 7
    %v1314 = vsub.s32 0, %v1313
    %v1315 = vrot.slane %v1212, %v1314
    %v1317 = vadd.f32 %v1310, %v1315
    %v1320 = vunpack.c.l.s4 1966171168
    %v1321 = vunpack.c.0.s8 %v1320
    %v1322 = vlaneseq
    %v1323 = vshrl.u32 %v1322, 7
    %v1324 = vsub.s32 %v1321, %v1323
    %v1325 = vrot.slane %v1317, %v1324
    %v1326 = vcombine.high %v1325, %v1325
    %v1328 = vunpack.c.l.s4 1966171168
    %v1329 = vunpack.c.0.s8 %v1328
    %v1330 = vlaneseq
    %v1331 = vshrl.u32 %v1330, 7
    %v1332 = vsub.s32 %v1329, %v1331
    %v1333 = vrot.slane %v1325, %v1332
    %v1335 = vunpack.c.l.s4 1966171168
    %v1336 = vunpack.c.0.s8 %v1335
    %v1337 = vlaneseq
    %v1338 = vshrl.u32 %v1337, 7
    %v1339 = vsub.s32 %v1336, %v1338
    %v1340 = vrot.slane %v1326, %v1339
    %v1341 = vlaneseq
    %v1342 = vshrl.u32 %v1341, 7
    %v1343 = vsub.s32 0, %v1342
    %v1344 = vrot.slane %v1333, %v1343
    %v1345 = vlaneseq
    %v1346 = vshrl.u32 %v1345, 7
    %v1347 = vsub.s32 0, %v1346
    %v1348 = vrot.slane %v1340, %v1347
    %1351 = vrot.lane.b32.xlu0 %v492, 64
    %v1352 = vpop.permute.xlu0 %1351
    %1353 = vrot.lane.b32.xlu0 %v493, 64
    %v1354 = vpop.permute.xlu0 %1353
    %v1357 = vmul.f32 %v1344, %v1352
    %v1358 = vmul.f32 %v1348, %v1354
    %s1359 = scalar_lea.vmem [#allocation8], 32
    %v1360 = vld [vmem:[%s1359] sm:$0xff]
    %v1361 = vld [vmem:[%s1359 + $0x8] sm:$0xff]
    %v1362 = vld [vmem:[%s1359 + $0x10] sm:$0xff]
    %v1363 = vld [vmem:[%s1359 + $0x18] sm:$0xff]
    %s1364 = scalar_lea.vmem %s14, 1
    %v1365 = vld [vmem:[%s1364] sm:$0x1]
    %v1367 = vlaneseq
    %v1368 = vshrl.u32 %v1367, 7
    %v1369 = vsub.s32 0, %v1368
    %v1370 = vrot.slane %v1365, %v1369
    %v1373 = vsel %vm195, %v1357, 0
    %v1376 = vsel %vm195, %v1358, 0
    %1378 = vmatprep.subr.mxu0 0.0
    %1379 = vmatpush1.msra.mxu0 %v1360
    %1380 = vmatprep.subr.mxu0 0.0
    %1381 = vmatpush1.msra.mxu0 %v1361
    %1382 = vmatprep.subr.mxu0 0.0
    %1383 = vmatpush1.msra.mxu0 %v1362
    %1384 = vmatprep.subr.mxu0 0.0
    %1385 = vmatpush1.msra.mxu0 %v1363
    %1386 = vmatprep.subr.mxu0 0.0
    %1387 = vmatpush1.msra.mxu0 0.0
    %1388 = vmatprep.subr.mxu0 0.0
    %1389 = vmatpush1.msra.mxu0 0.0
    %1390 = vmatprep.subr.mxu0 0.0
    %1391 = vmatpush1.msra.mxu0 0.0
    %1392 = vmatprep.subr.mxu0 0.0
    %1393 = vmatpush1.msra.mxu0 0.0
    %1394 = vmatprep.subr.mxu0 0.0
    %1395 = vmatpush1.msra.mxu0 0.0
    %1396 = vmatprep.subr.mxu0 0.0
    %1397 = vmatpush1.msra.mxu0 0.0
    %1398 = vmatprep.subr.mxu0 0.0
    %1399 = vmatpush1.msra.mxu0 0.0
    %1400 = vmatprep.subr.mxu0 0.0
    %1401 = vmatpush1.msra.mxu0 0.0
    %1402 = vmatprep.subr.mxu0 0.0
    %1403 = vmatpush1.msra.mxu0 0.0
    %1404 = vmatprep.subr.mxu0 0.0
    %1405 = vmatpush1.msra.mxu0 0.0
    %1406 = vmatprep.subr.mxu0 0.0
    %1407 = vmatpush1.msra.mxu0 0.0
    %1408 = vmatprep.subr.mxu0 0.0
    %1409 = vmatpush1.msra.mxu0 0.0
    %1410 = vmatprep.subr.mxu0 0.0
    %1411 = vmatpush1.msra.mxu0 0.0
    %1412 = vmatprep.subr.mxu0 0.0
    %1413 = vmatpush1.msra.mxu0 0.0
    %1414 = vmatprep.subr.mxu0 0.0
    %1415 = vmatpush1.msra.mxu0 0.0
    %1416 = vmatprep.subr.mxu0 0.0
    %1417 = vmatpush1.msra.mxu0 0.0
    %1418 = vmatprep.subr.mxu0 0.0
    %1419 = vmatpush1.msra.mxu0 0.0
    %1420 = vmatprep.subr.mxu0 0.0
    %1421 = vmatpush1.msra.mxu0 0.0
    %1422 = vmatprep.subr.mxu0 0.0
    %1423 = vmatpush1.msra.mxu0 0.0
    %1424 = vmatprep.subr.mxu0 0.0
    %1425 = vmatpush1.msra.mxu0 0.0
    %1426 = vmatprep.subr.mxu0 0.0
    %1427 = vmatpush1.msra.mxu0 0.0
    %1428 = vmatprep.subr.mxu0 0.0
    %1429 = vmatpush1.msra.mxu0 0.0
    %1430 = vmatprep.subr.mxu0 0.0
    %1431 = vmatpush1.msra.mxu0 0.0
    %1432 = vmatprep.subr.mxu0 0.0
    %1433 = vmatpush1.msra.mxu0 0.0
    %1434 = vmatprep.subr.mxu0 0.0
    %1435 = vmatpush1.msra.mxu0 0.0
    %1436 = vmatprep.subr.mxu0 0.0
    %1437 = vmatpush1.msra.mxu0 0.0
    %1438 = vmatprep.subr.mxu0 0.0
    %1439 = vmatpush1.msra.mxu0 0.0
    %1440 = vmatprep.subr.mxu0 0.0
    %1441 = vmatpush1.msra.mxu0 0.0
    %1442 = vmatprep.mubr.f32.mxu0 0.0
    %1443 = vmatmul.mubr.f32.gmra.mrb[0].mxu0 %v1373
    %v1444 = vpop.f32.mrb[0].mxu0
    %v1445 = vadd.f32 %v1370, %v1444
    %v1446 = vpop.f32.mrb[0].mxu0
    %1447 = vmatprep.mubr.f32.mxu0 0.0
    %1448 = vmatmul.mubr.f32.gmra.mrb[0].mxu0 %v1376
    %v1449 = vpop.f32.mrb[0].mxu0
    %v1450 = vadd.f32 %v1370, %v1449
    %v1451 = vpop.f32.mrb[0].mxu0
    %1452 = vdwg.mxu0
    %v1453 = vmax.f32 %v1445, 0.0
    %v1454 = vmax.f32 %v1450, 0.0
    %s1455 = scalar_lea.vmem [#allocation10], 64
    %v1456 = vld [vmem:[%s1455] sm:$0xff]
    %v1457 = vld [vmem:[%s1455 + $0x8] sm:$0xff]
    %v1458 = vld [vmem:[%s1455 + $0x10] sm:$0xff]
    %v1459 = vld [vmem:[%s1455 + $0x18] sm:$0xff]
    %v1460 = vld [vmem:[%s1455 + $0x20] sm:$0xff]
    %v1461 = vld [vmem:[%s1455 + $0x28] sm:$0xff]
    %v1462 = vld [vmem:[%s1455 + $0x30] sm:$0xff]
    %v1463 = vld [vmem:[%s1455 + $0x38] sm:$0xff]
    %s1464 = scalar_lea.vmem %s16, 1
    %v1465 = vld [vmem:[%s1464] sm:$0x1]
    %v1467 = vlaneseq
    %v1468 = vshrl.u32 %v1467, 7
    %v1469 = vsub.s32 0, %v1468
    %v1470 = vrot.slane %v1465, %v1469
    %v1473 = vsel %vm611, %v1453, 0
    %v1476 = vsel %vm611, %v1454, 0
    %1478 = vmatprep.subr.mxu0 0.0
    %1479 = vmatpush1.msra.mxu0 %v1456
    %1480 = vmatprep.subr.mxu0 0.0
    %1481 = vmatpush1.msra.mxu0 %v1457
    %1482 = vmatprep.subr.mxu0 0.0
    %1483 = vmatpush1.msra.mxu0 %v1458
    %1484 = vmatprep.subr.mxu0 0.0
    %1485 = vmatpush1.msra.mxu0 %v1459
    %1486 = vmatprep.subr.mxu0 0.0
    %1487 = vmatpush1.msra.mxu0 %v1460
    %1488 = vmatprep.subr.mxu0 0.0
    %1489 = vmatpush1.msra.mxu0 %v1461
    %1490 = vmatprep.subr.mxu0 0.0
    %1491 = vmatpush1.msra.mxu0 %v1462
    %1492 = vmatprep.subr.mxu0 0.0
    %1493 = vmatpush1.msra.mxu0 %v1463
    %1494 = vmatprep.subr.mxu0 0.0
    %1495 = vmatpush1.msra.mxu0 0.0
    %1496 = vmatprep.subr.mxu0 0.0
    %1497 = vmatpush1.msra.mxu0 0.0
    %1498 = vmatprep.subr.mxu0 0.0
    %1499 = vmatpush1.msra.mxu0 0.0
    %1500 = vmatprep.subr.mxu0 0.0
    %1501 = vmatpush1.msra.mxu0 0.0
    %1502 = vmatprep.subr.mxu0 0.0
    %1503 = vmatpush1.msra.mxu0 0.0
    %1504 = vmatprep.subr.mxu0 0.0
    %1505 = vmatpush1.msra.mxu0 0.0
    %1506 = vmatprep.subr.mxu0 0.0
    %1507 = vmatpush1.msra.mxu0 0.0
    %1508 = vmatprep.subr.mxu0 0.0
    %1509 = vmatpush1.msra.mxu0 0.0
    %1510 = vmatprep.subr.mxu0 0.0
    %1511 = vmatpush1.msra.mxu0 0.0
    %1512 = vmatprep.subr.mxu0 0.0
    %1513 = vmatpush1.msra.mxu0 0.0
    %1514 = vmatprep.subr.mxu0 0.0
    %1515 = vmatpush1.msra.mxu0 0.0
    %1516 = vmatprep.subr.mxu0 0.0
    %1517 = vmatpush1.msra.mxu0 0.0
    %1518 = vmatprep.subr.mxu0 0.0
    %1519 = vmatpush1.msra.mxu0 0.0
    %1520 = vmatprep.subr.mxu0 0.0
    %1521 = vmatpush1.msra.mxu0 0.0
    %1522 = vmatprep.subr.mxu0 0.0
    %1523 = vmatpush1.msra.mxu0 0.0
    %1524 = vmatprep.subr.mxu0 0.0
    %1525 = vmatpush1.msra.mxu0 0.0
    %1526 = vmatprep.subr.mxu0 0.0
    %1527 = vmatpush1.msra.mxu0 0.0
    %1528 = vmatprep.subr.mxu0 0.0
    %1529 = vmatpush1.msra.mxu0 0.0
    %1530 = vmatprep.subr.mxu0 0.0
    %1531 = vmatpush1.msra.mxu0 0.0
    %1532 = vmatprep.subr.mxu0 0.0
    %1533 = vmatpush1.msra.mxu0 0.0
    %1534 = vmatprep.subr.mxu0 0.0
    %1535 = vmatpush1.msra.mxu0 0.0
    %1536 = vmatprep.subr.mxu0 0.0
    %1537 = vmatpush1.msra.mxu0 0.0
    %1538 = vmatprep.subr.mxu0 0.0
    %1539 = vmatpush1.msra.mxu0 0.0
    %1540 = vmatprep.subr.mxu0 0.0
    %1541 = vmatpush1.msra.mxu0 0.0
    %1542 = vmatprep.mubr.f32.mxu0 0.0
    %1543 = vmatmul.mubr.f32.gmra.mrb[0].mxu0 %v1473
    %v1544 = vpop.f32.mrb[0].mxu0
    %v1545 = vadd.f32 %v1470, %v1544
    %v1546 = vpop.f32.mrb[0].mxu0
    %1547 = vmatprep.mubr.f32.mxu0 0.0
    %1548 = vmatmul.mubr.f32.gmra.mrb[0].mxu0 %v1476
    %v1549 = vpop.f32.mrb[0].mxu0
    %v1550 = vadd.f32 %v1470, %v1549
    %v1551 = vpop.f32.mrb[0].mxu0
    %1552 = vdwg.mxu0
    %v1553 = vmul.f32 %v1453, %v169
    %v1554 = vmul.f32 %v1454, %v176
    %v1555 = vsel %vm611, %v1553, 0.0
    %v1556 = vrot.slane %v1555, 4
    %v1557 = vadd.f32 %v1555, %v1556
    %v1558 = vrot.slane %v1557, 2
    %v1559 = vadd.f32 %v1557, %v1558
    %v1560 = vrot.slane %v1559, 1
    %v1561 = vadd.f32 %v1559, %v1560
    %v1562 = vsel %vm611, %v1554, 0.0
    %v1563 = vrot.slane %v1562, 4
    %v1564 = vadd.f32 %v1562, %v1563
    %v1565 = vrot.slane %v1564, 2
    %v1566 = vadd.f32 %v1564, %v1565
    %v1567 = vrot.slane %v1566, 1
    %v1568 = vadd.f32 %v1566, %v1567
    %v1569 = vmul.f32 %v1561, %v191
    %v1570 = vmul.f32 %v1568, %v192
    %v1573 = vsel %vm507, %v1570, %v1569
    %v1574 = vsel %vm611, %v1573, 0
    %1576 = vmatprep.subr.mxu0 0.0
    %1577 = vmatpush1.msra.mxu0 %v1456
    %1578 = vmatprep.subr.mxu0 0.0
    %1579 = vmatpush1.msra.mxu0 %v1457
    %1580 = vmatprep.subr.mxu0 0.0
    %1581 = vmatpush1.msra.mxu0 %v1458
    %1582 = vmatprep.subr.mxu0 0.0
    %1583 = vmatpush1.msra.mxu0 %v1459
    %1584 = vmatprep.subr.mxu0 0.0
    %1585 = vmatpush1.msra.mxu0 %v1460
    %1586 = vmatprep.subr.mxu0 0.0
    %1587 = vmatpush1.msra.mxu0 %v1461
    %1588 = vmatprep.subr.mxu0 0.0
    %1589 = vmatpush1.msra.mxu0 %v1462
    %1590 = vmatprep.subr.mxu0 0.0
    %1591 = vmatpush1.msra.mxu0 %v1463
    %1592 = vmatprep.subr.mxu0 0.0
    %1593 = vmatpush1.msra.mxu0 0.0
    %1594 = vmatprep.subr.mxu0 0.0
    %1595 = vmatpush1.msra.mxu0 0.0
    %1596 = vmatprep.subr.mxu0 0.0
    %1597 = vmatpush1.msra.mxu0 0.0
    %1598 = vmatprep.subr.mxu0 0.0
    %1599 = vmatpush1.msra.mxu0 0.0
    %1600 = vmatprep.subr.mxu0 0.0
    %1601 = vmatpush1.msra.mxu0 0.0
    %1602 = vmatprep.subr.mxu0 0.0
    %1603 = vmatpush1.msra.mxu0 0.0
    %1604 = vmatprep.subr.mxu0 0.0
    %1605 = vmatpush1.msra.mxu0 0.0
    %1606 = vmatprep.subr.mxu0 0.0
    %1607 = vmatpush1.msra.mxu0 0.0
    %1608 = vmatprep.subr.mxu0 0.0
    %1609 = vmatpush1.msra.mxu0 0.0
    %1610 = vmatprep.subr.mxu0 0.0
    %1611 = vmatpush1.msra.mxu0 0.0
    %1612 = vmatprep.subr.mxu0 0.0
    %1613 = vmatpush1.msra.mxu0 0.0
    %1614 = vmatprep.subr.mxu0 0.0
    %1615 = vmatpush1.msra.mxu0 0.0
    %1616 = vmatprep.subr.mxu0 0.0
    %1617 = vmatpush1.msra.mxu0 0.0
    %1618 = vmatprep.subr.mxu0 0.0
    %1619 = vmatpush1.msra.mxu0 0.0
    %1620 = vmatprep.subr.mxu0 0.0
    %1621 = vmatpush1.msra.mxu0 0.0
    %1622 = vmatprep.subr.mxu0 0.0
    %1623 = vmatpush1.msra.mxu0 0.0
    %1624 = vmatprep.subr.mxu0 0.0
    %1625 = vmatpush1.msra.mxu0 0.0
    %1626 = vmatprep.subr.mxu0 0.0
    %1627 = vmatpush1.msra.mxu0 0.0
    %1628 = vmatprep.subr.mxu0 0.0
    %1629 = vmatpush1.msra.mxu0 0.0
    %1630 = vmatprep.subr.mxu0 0.0
    %1631 = vmatpush1.msra.mxu0 0.0
    %1632 = vmatprep.subr.mxu0 0.0
    %1633 = vmatpush1.msra.mxu0 0.0
    %1634 = vmatprep.subr.mxu0 0.0
    %1635 = vmatpush1.msra.mxu0 0.0
    %1636 = vmatprep.subr.mxu0 0.0
    %1637 = vmatpush1.msra.mxu0 0.0
    %1638 = vmatprep.subr.mxu0 0.0
    %1639 = vmatpush1.msra.mxu0 0.0
    %1640 = vmatprep.mubr.f32.mxu0 0.0
    %1641 = vmatmul.mubr.f32.gmra.mrb[0].mxu0 %v1574
    %v1642 = vpop.f32.mrb[0].mxu0
    %v1643 = vadd.f32 %v1470, %v1642
    %v1644 = vpop.f32.mrb[0].mxu0
    %1645 = vdwg.mxu0
    %v1646 = vxor.u32 %v1643, 2147483648
    %v1647 = vmul.f32 %v1646, 1.442695
    %v1648 = vpow.pop %v1647
    %v1649 = vadd.f32 %v1648, 1.0
    %v1650 = vrcp.pop %v1649
    %v1651 = vmul.f32 1.0, %v1650
    %v1652 = vsel %vm1040, -1e+09, %v1545
    %v1653 = vsel %vm1041, -1e+09, %v1550
    %v1654 = vsel %vm195, %v1652, -inf
    %v1655 = vrot.slane %v1654, 4
    %v1656 = vmax.f32 %v1654, %v1655
    %v1657 = vrot.slane %v1656, 2
    %v1658 = vmax.f32 %v1656, %v1657
    %v1659 = vrot.slane %v1658, 1
    %v1660 = vmax.f32 %v1658, %v1659
    %v1661 = vsel %vm195, %v1653, -inf
    %v1662 = vrot.slane %v1661, 4
    %v1663 = vmax.f32 %v1661, %v1662
    %v1664 = vrot.slane %v1663, 2
    %v1665 = vmax.f32 %v1663, %v1664
    %v1666 = vrot.slane %v1665, 1
    %v1667 = vmax.f32 %v1665, %v1666
    %v1668 = vsub.f32 %v1652, %v1660
    %v1669 = vsub.f32 %v1653, %v1667
    %v1670 = vmul.f32 %v1668, 1.442695
    %v1671 = vpow.pop %v1670
    %v1672 = vmul.f32 %v1669, 1.442695
    %v1673 = vpow.pop %v1672
    %v1674 = vsel %vm195, %v1671, 0.0
    %v1675 = vrot.slane %v1674, 4
    %v1676 = vadd.f32 %v1674, %v1675
    %v1677 = vrot.slane %v1676, 2
    %v1678 = vadd.f32 %v1676, %v1677
    %v1679 = vrot.slane %v1678, 1
    %v1680 = vadd.f32 %v1678, %v1679
    %v1681 = vsel %vm195, %v1673, 0.0
    %v1682 = vrot.slane %v1681, 4
    %v1683 = vadd.f32 %v1681, %v1682
    %v1684 = vrot.slane %v1683, 2
    %v1685 = vadd.f32 %v1683, %v1684
    %v1686 = vrot.slane %v1685, 1
    %v1687 = vadd.f32 %v1685, %v1686
    %v1688 = vrcp.pop %v1680
    %v1689 = vmul.f32 %v1671, %v1688
    %v1690 = vrcp.pop %v1687
    %v1691 = vmul.f32 %v1673, %v1690
    %1692 = vrot.lane.b32.xlu0 %v492, 32
    %v1693 = vpop.permute.xlu0 %1692
    %1694 = vrot.lane.b32.xlu0 %v493, 32
    %v1695 = vpop.permute.xlu0 %1694
    %v1698 = vmul.f32 %v1689, %v1693
    %v1699 = vmul.f32 %v1691, %v1695
    %v1700 = vsel %vm195, %v1698, 0.0
    %v1701 = vrot.slane %v1700, 4
    %v1702 = vadd.f32 %v1700, %v1701
    %v1703 = vrot.slane %v1702, 2
    %v1704 = vadd.f32 %v1702, %v1703
    %v1705 = vrot.slane %v1704, 1
    %v1706 = vadd.f32 %v1704, %v1705
    %v1707 = vsel %vm195, %v1699, 0.0
    %v1708 = vrot.slane %v1707, 4
    %v1709 = vadd.f32 %v1707, %v1708
    %v1710 = vrot.slane %v1709, 2
    %v1711 = vadd.f32 %v1709, %v1710
    %v1712 = vrot.slane %v1711, 1
    %v1713 = vadd.f32 %v1711, %v1712
    %v1716 = vsel %vm507, %v1713, %v1706
    %1717 = vrot.lane.b32.xlu0 %v1716, 32
    %v1718 = vpop.permute.xlu0 %1717
    %v1720 = vmul.f32 %v1317, %v1718
    %v1721 = vmul.f32 %v1720, %v1651
    %1724 = vrot.lane.b32.xlu0 %v1721, 32
    %v1725 = vpop.permute.xlu0 %1724
    %v1727 = vsel %vm195, %v508, %v1113
    %v1728 = vsel %vm611, %v1727, %v1725
    %v1729 = vld [vmem:[%s17] sm:$0xff]
    %v1730 = vld [vmem:[%s17 + $0x8] sm:$0xff]
    %v1731 = vld [vmem:[%s17 + $0x10] sm:$0xff]
    %v1732 = vld [vmem:[%s17 + $0x18] sm:$0xff]
    %v1733 = vld [vmem:[%s17 + $0x20] sm:$0xff]
    %v1734 = vld [vmem:[%s17 + $0x28] sm:$0xff]
    %v1735 = vld [vmem:[%s17 + $0x30] sm:$0xff]
    %v1736 = vld [vmem:[%s17 + $0x38] sm:$0xff]
    %v1737 = vld [vmem:[%s17 + $0x40] sm:$0xff]
    %v1738 = vld [vmem:[%s17 + $0x48] sm:$0xff]
    %v1739 = vld [vmem:[%s17 + $0x50] sm:$0xff]
    %v1740 = vld [vmem:[%s17 + $0x58] sm:$0xff]
    %v1741 = vld [vmem:[#allocation11] sm:$0x1]
    %v1743 = vlaneseq
    %v1744 = vshrl.u32 %v1743, 7
    %v1745 = vsub.s32 0, %v1744
    %v1746 = vrot.slane %v1741, %v1745
    %vm1748 = vcmask 785408
    %v1750 = vsel %vm1748, %v1728, 0
    %1752 = vmatprep.subr.mxu0 0.0
    %1753 = vmatpush1.msra.mxu0 %v1729
    %1754 = vmatprep.subr.mxu0 0.0
    %1755 = vmatpush1.msra.mxu0 %v1730
    %1756 = vmatprep.subr.mxu0 0.0
    %1757 = vmatpush1.msra.mxu0 %v1731
    %1758 = vmatprep.subr.mxu0 0.0
    %1759 = vmatpush1.msra.mxu0 %v1732
    %1760 = vmatprep.subr.mxu0 0.0
    %1761 = vmatpush1.msra.mxu0 %v1733
    %1762 = vmatprep.subr.mxu0 0.0
    %1763 = vmatpush1.msra.mxu0 %v1734
    %1764 = vmatprep.subr.mxu0 0.0
    %1765 = vmatpush1.msra.mxu0 %v1735
    %1766 = vmatprep.subr.mxu0 0.0
    %1767 = vmatpush1.msra.mxu0 %v1736
    %1768 = vmatprep.subr.mxu0 0.0
    %1769 = vmatpush1.msra.mxu0 %v1737
    %1770 = vmatprep.subr.mxu0 0.0
    %1771 = vmatpush1.msra.mxu0 %v1738
    %1772 = vmatprep.subr.mxu0 0.0
    %1773 = vmatpush1.msra.mxu0 %v1739
    %1774 = vmatprep.subr.mxu0 0.0
    %1775 = vmatpush1.msra.mxu0 %v1740
    %1776 = vmatprep.subr.mxu0 0.0
    %1777 = vmatpush1.msra.mxu0 0.0
    %1778 = vmatprep.subr.mxu0 0.0
    %1779 = vmatpush1.msra.mxu0 0.0
    %1780 = vmatprep.subr.mxu0 0.0
    %1781 = vmatpush1.msra.mxu0 0.0
    %1782 = vmatprep.subr.mxu0 0.0
    %1783 = vmatpush1.msra.mxu0 0.0
    %1784 = vmatprep.subr.mxu0 0.0
    %1785 = vmatpush1.msra.mxu0 0.0
    %1786 = vmatprep.subr.mxu0 0.0
    %1787 = vmatpush1.msra.mxu0 0.0
    %1788 = vmatprep.subr.mxu0 0.0
    %1789 = vmatpush1.msra.mxu0 0.0
    %1790 = vmatprep.subr.mxu0 0.0
    %1791 = vmatpush1.msra.mxu0 0.0
    %1792 = vmatprep.subr.mxu0 0.0
    %1793 = vmatpush1.msra.mxu0 0.0
    %1794 = vmatprep.subr.mxu0 0.0
    %1795 = vmatpush1.msra.mxu0 0.0
    %1796 = vmatprep.subr.mxu0 0.0
    %1797 = vmatpush1.msra.mxu0 0.0
    %1798 = vmatprep.subr.mxu0 0.0
    %1799 = vmatpush1.msra.mxu0 0.0
    %1800 = vmatprep.subr.mxu0 0.0
    %1801 = vmatpush1.msra.mxu0 0.0
    %1802 = vmatprep.subr.mxu0 0.0
    %1803 = vmatpush1.msra.mxu0 0.0
    %1804 = vmatprep.subr.mxu0 0.0
    %1805 = vmatpush1.msra.mxu0 0.0
    %1806 = vmatprep.subr.mxu0 0.0
    %1807 = vmatpush1.msra.mxu0 0.0
    %1808 = vmatprep.subr.mxu0 0.0
    %1809 = vmatpush1.msra.mxu0 0.0
    %1810 = vmatprep.subr.mxu0 0.0
    %1811 = vmatpush1.msra.mxu0 0.0
    %1812 = vmatprep.subr.mxu0 0.0
    %1813 = vmatpush1.msra.mxu0 0.0
    %1814 = vmatprep.subr.mxu0 0.0
    %1815 = vmatpush1.msra.mxu0 0.0
    %1816 = vmatprep.mubr.f32.mxu0 0.0
    %1817 = vmatmul.mubr.f32.gmra.mrb[0].mxu0 %v1750
    %v1818 = vpop.f32.mrb[0].mxu0
    %v1819 = vadd.f32 %v1746, %v1818
    %v1820 = vpop.f32.mrb[0].mxu0
    %1821 = vdwg.mxu0
    %vm1822 = vcmask 254976
    %v1823 = vsel %vm1822, %v1819, 0.0
    %1824 = vadd.xlane.f32.xlu0 %v1823
    %v1825 = vpop.xlane.xlu0 %1824
    %v1826 = vrcp.pop 32.0
    %v1827 = vmul.f32 %v1825, %v1826
    %v1828 = vsub.f32 %v1819, %v1827
    %v1829 = vmul.f32 %v1828, %v1828
    %v1830 = vsel %vm1822, %v1829, 0.0
    %1831 = vadd.xlane.f32.xlu0 %v1830
    %v1832 = vpop.xlane.xlu0 %1831
    %v1833 = vmul.f32 %v1832, %v1826
    %v1834 = vadd.f32 %v1833, 1e-05
    %v1835 = vrsqrt.pop %v1834
    %v1836 = vmul.f32 %v1828, %v1835
    %v1837 = vld [vmem:[#allocation13] sm:$0x1]
    %v1839 = vlaneseq
    %v1840 = vshrl.u32 %v1839, 7
    %v1841 = vsub.s32 0, %v1840
    %v1842 = vrot.slane %v1837, %v1841
    %v1844 = vmul.f32 %v1836, %v1842
    %v1845 = vld [vmem:[%s20] sm:$0x1]
    %v1847 = vlaneseq
    %v1848 = vshrl.u32 %v1847, 7
    %v1849 = vsub.s32 0, %v1848
    %v1850 = vrot.slane %v1845, %v1849
    %v1852 = vadd.f32 %v1844, %v1850
    %1853 = vst.msk [vmem:[#allocation14] sm:$0x3] %vm1822, %v1852
    // Predicated region
    $region114: #{dec_block_forward.1} parent=1 // pred_check
      _
    $region115: #{dec_block_forward.1} parent=1 // pred_check_branch
      %1855 = sbr.rel (0) target = $region117
    $region116: #{dec_block_forward.1} parent=1 // pred_region
      %s1857 = ssub.s32 32, 32
      %1858 = vsyncadd [#allocation4], %s1857
      %s1860 = sshll.u32 [#allocation14], 4
      %s1861 = int_to_ptr.vmem [resolvable:$true] %s1860
      %1863 = dma.vmem_to_hbm [thread:$0]  %s1861, 32, %s21, [#allocation4]
    $region117: #{dec_block_forward.1} parent=1 // pred_fallthru
      _
    // Predicated region
    $region118: #{dec_block_forward.1} parent=1 // pred_check
      _
    $region119: #{dec_block_forward.1} parent=1 // pred_check_branch
      %1865 = sbr.rel (0) target = $region121
    $region120: #{dec_block_forward.1} parent=1 // pred_region
      %1866 = dma.done [#allocation4], 32
    $region121: #{dec_block_forward.1} parent=1 // pred_fallthru
      _
    %1867 = vsyncpa [#allocation3], 1
    %1868 = vsyncpa [#allocation6], 1
    %1869 = vsyncpa [#allocation9], 1
    %1870 = vsyncpa [#allocation12], 1
    %1871 = vsyncpa [#allocation4], 1

</llo_original>
